<compile_context>
chip_gen: v7x
topology: tpu7x:2x2x1
jax: 0.10.0
libtpu: 0.0.40
codegen_flags: <defaults>
</compile_context>

<pallas_src>
import math

import jax
import jax.numpy as jnp
from jax.experimental import pallas as pl
from jax.experimental.pallas import tpu as pltpu

MXU_DTYPE = jnp.bfloat16          # MXU input dtype + pos/neg intermediate dtype
VMEM_LIMIT = 48 * 1024 * 1024     # <= v7x 64 MiB physical, well under v5e/v6e
XW_RESIDENT_BUDGET = 8 * 1024 * 1024  # hold XW fully in VMEM if 2 bufs fit this


def _round_up(x, m):
    return ((x + m - 1) // m) * m


def _pick_tile(n, candidates=(2048, 1024, 512, 256, 128)):
    # Prefer the largest candidate that still leaves >= 2 blocks so the
    # "parallel" grid axis can feed both v7x TensorCores.
    for c in candidates:
        if n % c == 0 and n // c >= 2:
            return c
    for c in candidates:
        if n % c == 0:
            return c
    return n


# ----------------------------------------------------------------------------
# Kernel 1: fused GCN (positive | negative)  ->  relu(A @ [XW | XW_perm] + b)
#   grid = (N/tm, N/tk); A tile (tm, tk) streamed once; concatenated XW either
#   fully VMEM-resident (constant block index) or tiled (tk, 2*Hp); single
#   (tm, 2*Hp) f32 accumulator; bf16 output slab.
# ----------------------------------------------------------------------------
def _make_gcn_kernel(tk, xw_resident):
    def kernel(a_ref, xw_ref, b_ref, out_ref, acc_ref):
        k = pl.program_id(1)

        @pl.when(k == 0)
        def _():
            acc_ref[...] = jnp.zeros_like(acc_ref)

        if xw_resident:
            start = pl.multiple_of(k * tk, tk)
            xw_blk = xw_ref[pl.ds(start, tk), :]       # slice of resident RHS
        else:
            xw_blk = xw_ref[...]

        acc_ref[...] += jnp.dot(a_ref[...], xw_blk,
                                preferred_element_type=jnp.float32)

        @pl.when(k == pl.num_programs(1) - 1)
        def _():
            out_ref[...] = jnp.maximum(acc_ref[...] + b_ref[...],
                                       0.0).astype(out_ref.dtype)

    return kernel


def gcn_fused(a_p, xwcat_p, b_p):
    n_p = a_p.shape[0]
    h2 = xwcat_p.shape[1]
    tm = _pick_tile(n_p)
    tk = _pick_tile(n_p)

    xw_bytes = xwcat_p.size * xwcat_p.dtype.itemsize
    xw_resident = 2 * xw_bytes <= XW_RESIDENT_BUDGET   # account for 2 buffers
    if xw_resident:
        # Constant block index -> fetched from HBM exactly once.
        xw_spec = pl.BlockSpec((n_p, h2), lambda i, k: (0, 0))
    else:
        xw_spec = pl.BlockSpec((tk, h2), lambda i, k: (k, 0))

    return pl.pallas_call(
        _make_gcn_kernel(tk, xw_resident),
        out_shape=jax.ShapeDtypeStruct((n_p, h2), MXU_DTYPE),
        grid_spec=pltpu.PrefetchScalarGridSpec(
            num_scalar_prefetch=0,
            grid=(n_p // tm, n_p // tk),
            in_specs=[pl.BlockSpec((tm, tk), lambda i, k: (i, k)),
                      xw_spec,
                      # bias: constant index -> single fetch for the whole call
                      pl.BlockSpec((1, h2), lambda i, k: (0, 0))],
            out_specs=pl.BlockSpec((tm, h2), lambda i, k: (i, 0)),
            scratch_shapes=[pltpu.VMEM((tm, h2), jnp.float32)]),
        compiler_params=pltpu.CompilerParams(
            dimension_semantics=("parallel", "arbitrary"),
            vmem_limit_bytes=VMEM_LIMIT),
    )(a_p, xwcat_p, b_p)


# ----------------------------------------------------------------------------
# Kernel 2: graph embeddings  ->  sigmoid((subAdj @ positive) * (1/norm))
#   bf16 inputs, f32 accumulation directly into the resident output block.
# ----------------------------------------------------------------------------
def graph_emb_kernel(sub_ref, pos_ref, norm_ref, ge_ref):
    k = pl.program_id(0)

    @pl.when(k == 0)
    def _():
        ge_ref[...] = jnp.zeros_like(ge_ref)

    ge_ref[...] += jnp.dot(sub_ref[...], pos_ref[...],
                           preferred_element_type=jnp.float32)

    @pl.when(k == pl.num_programs(0) - 1)
    def _():
        inv = pl.reciprocal(norm_ref[...], approx=True)   # EUP slot, (Gp, 1)
        ge_ref[...] = jax.nn.sigmoid(ge_ref[...] * inv)


def graph_embeddings(sub_p, posneg, norm_p, h_p):
    g_p, n_p = sub_p.shape
    tk = _pick_tile(n_p)
    return pl.pallas_call(
        graph_emb_kernel,
        out_shape=jax.ShapeDtypeStruct((g_p, h_p), jnp.float32),
        grid_spec=pltpu.PrefetchScalarGridSpec(
            num_scalar_prefetch=0,
            grid=(n_p // tk,),
            in_specs=[pl.BlockSpec((g_p, tk), lambda k: (0, k)),
                      # first Hp columns of the posneg slab == positive
                      pl.BlockSpec((tk, h_p), lambda k: (k, 0)),
                      pl.BlockSpec((g_p, 1), lambda k: (0, 0))],
            out_specs=pl.BlockSpec((g_p, h_p), lambda k: (0, 0))),
        compiler_params=pltpu.CompilerParams(
            dimension_semantics=("arbitrary",),
            vmem_limit_bytes=VMEM_LIMIT),
    )(sub_p, posneg, norm_p)


# ----------------------------------------------------------------------------
# Kernel 3: fused summary gather + discriminator scores + BCE-with-logits.
#   summary gather = one-hot(node_sub_graph) @ graph_emb  (stays in VMEM).
#   Row-sums done on the MXU so the losses land lane-dense in a (2, N) slab.
# ----------------------------------------------------------------------------
def score_loss_kernel(nsg_ref, ge_ref, pn_ref, loss_ref):
    tm = pn_ref.shape[0]
    g_p, h_p = ge_ref.shape

    # summary = graph_emb[node_sub_graph]  (one-hot matmul, stays in VMEM)
    one_hot = (nsg_ref[...] ==
               jax.lax.broadcasted_iota(jnp.int32, (tm, g_p), 1)
               ).astype(jnp.float32)                              # (tm, Gp)
    summary = jnp.dot(one_hot, ge_ref[...],
                      preferred_element_type=jnp.float32)         # (tm, Hp)

    pn = pn_ref[...].astype(jnp.float32)                          # (tm, 2*Hp)
    prod_pos = pn[:, :h_p] * summary
    prod_neg = pn[:, h_p:] * summary

    # Row-sum as ones(1,Hp) · prod^T -> result is (1, tm), lane-oriented.
    ones_row = jnp.ones((1, h_p), jnp.float32)
    dims = (((1,), (1,)), ((), ()))
    pos_score = jax.lax.dot_general(ones_row, prod_pos, dims,
                                    preferred_element_type=jnp.float32)
    neg_score = jax.lax.dot_general(ones_row, prod_neg, dims,
                                    preferred_element_type=jnp.float32)

    # BCEWithLogits: target=1 -> softplus(-x);  target=0 -> softplus(x).
    z = jnp.concatenate([-pos_score, neg_score], axis=0)          # (2, tm)
    loss_ref[...] = jnp.maximum(z, 0.0) + jnp.log1p(jnp.exp(-jnp.abs(z)))


def scores_and_losses(nsg_p, graph_emb, posneg, h_p):
    n_p = posneg.shape[0]
    g_p = graph_emb.shape[0]
    tm = _pick_tile(n_p)
    return pl.pallas_call(
        score_loss_kernel,
        out_shape=jax.ShapeDtypeStruct((2, n_p), jnp.float32),
        grid_spec=pltpu.PrefetchScalarGridSpec(
            num_scalar_prefetch=0,
            grid=(n_p // tm,),
            in_specs=[pl.BlockSpec((tm, 1), lambda i: (i, 0)),
                      pl.BlockSpec((g_p, h_p), lambda i: (0, 0)),
                      pl.BlockSpec((tm, 2 * h_p), lambda i: (i, 0))],
            out_specs=pl.BlockSpec((2, tm), lambda i: (0, i))),
        compiler_params=pltpu.CompilerParams(
            dimension_semantics=("parallel",),
            vmem_limit_bytes=VMEM_LIMIT),
    )(nsg_p, graph_emb, posneg)


# ----------------------------------------------------------------------------
# DGI forward (glue in plain JAX: X@W hoist, permutation, padding, slicing)
# ----------------------------------------------------------------------------
def dgi_forward(features, sub_graph_adj, sub_graph_norm, node_sub_graph,
                node_list, a_norm, gcn_w, gcn_b, perm):
    del node_list  # unused in the PyTorch forward as well
    n, _ = features.shape
    h = gcn_w.shape[1]
    g = sub_graph_adj.shape[0]
    f32 = jnp.float32
    bf16 = MXU_DTYPE

    n_p = _round_up(n, 128)
    h_p = _round_up(max(h, 128), 128)
    g_p = _round_up(max(g, 8), 8)

    # Hoist X @ W (tiny, MXU-hostile K=F) out of the tiled A matmul, and use
    # X[perm] @ W == (X @ W)[perm] so the feature matmul runs exactly once.
    xw = jnp.dot(features.astype(f32), gcn_w.astype(f32))
    xw_perm = xw[perm]

    # Build padded operands DIRECTLY in bf16 (no f32 pad-then-cast round trip);
    # clean and permuted XW are concatenated along lanes into one 2*Hp RHS.
    a_p = jnp.zeros((n_p, n_p), bf16).at[:n, :n].set(a_norm.astype(bf16))
    xwcat_p = (jnp.zeros((n_p, 2 * h_p), bf16)
               .at[:n, :h].set(xw.astype(bf16))
               .at[:n, h_p:h_p + h].set(xw_perm.astype(bf16)))
    b_p = (jnp.zeros((1, 2 * h_p), f32)
           .at[:, :h].set(gcn_b.reshape(1, h))
           .at[:, h_p:h_p + h].set(gcn_b.reshape(1, h)))

    sub_p = jnp.zeros((g_p, n_p), bf16).at[:g, :n].set(
        sub_graph_adj.astype(bf16))                               # exact 0/1
    norm_p = jnp.ones((g_p, 1), f32).at[:g, :].set(sub_graph_norm.reshape(g, 1))
    nsg_p = jnp.zeros((n_p, 1), jnp.int32).at[:n, 0].set(
        node_sub_graph.astype(jnp.int32))

    # Kernel 1: fused positive|negative GCN (A streamed once, 256-wide MXU RHS).
    posneg = gcn_fused(a_p, xwcat_p, b_p)                 # (n_p, 2*h_p) bf16

    # Kernel 2: graph pooling + sigmoid (reads only the positive half).
    graph_emb = graph_embeddings(sub_p, posneg, norm_p, h_p)      # (g_p, h_p)

    # Kernel 3: fused summary gather + scores + BCE-with-logits (lane-dense).
    losses = scores_and_losses(nsg_p, graph_emb, posneg, h_p)     # (2, n_p)
    return losses[0, :n], losses[1, :n]


# ----------------------------------------------------------------------------
# Deterministic parameter / input construction
# ----------------------------------------------------------------------------
def xavier_uniform(key, shape):
    fan_in, fan_out = shape[0], shape[1]
    bound = math.sqrt(6.0 / (fan_in + fan_out))
    return jax.random.uniform(key, shape, jnp.float32, -bound, bound)


if __name__ == "__main__":
    N, F, H, G = 16, 8, 32, 4   # nodes, in_feats, n_hidden, num subgraphs

    key = jax.random.PRNGKey(0)
    k_feat, k_adj, k_w, k_disc, k_sub, k_perm = jax.random.split(key, 6)

    # Node features.
    features = jax.random.normal(k_feat, (N, F), jnp.float32)

    # Symmetric normalized adjacency with self loops: D^-1/2 (A+I) D^-1/2.
    edges = (jax.random.uniform(k_adj, (N, N)) < 0.25).astype(jnp.float32)
    adj = jnp.maximum(edges, edges.T) + jnp.eye(N, dtype=jnp.float32)
    deg = jnp.sum(adj, axis=1)
    d_inv_sqrt = 1.0 / jnp.sqrt(deg)
    a_norm = adj * d_inv_sqrt[:, None] * d_inv_sqrt[None, :]

    # GCN parameters (single GraphConv layer: in_feats -> n_hidden).
    gcn_w = xavier_uniform(k_w, (F, H))
    gcn_b = jnp.zeros((1, H), jnp.float32)

    # Discriminator parameter (xavier init) — present but unused in forward.
    disc_weight = xavier_uniform(k_disc, (H, H))
    _ = disc_weight

    # Subgraph membership; every subgraph gets >= 1 node so subGraphNorm > 0
    # (the reference forward also divides by it).
    node_sub_graph = jnp.concatenate(
        [jnp.arange(G, dtype=jnp.int32),
         jax.random.randint(k_sub, (N - G,), 0, G, dtype=jnp.int32)])
    sub_graph_adj = jax.nn.one_hot(node_sub_graph, G).T.astype(jnp.float32)   # (G, N)
    sub_graph_norm = jnp.sum(sub_graph_adj, axis=1, keepdims=True)            # (G, 1)
    node_list = jnp.arange(N, dtype=jnp.int32)                                # unused

    # Deterministic corruption permutation (torch.randperm equivalent).
    perm = jax.random.permutation(k_perm, N)

    pos_loss, neg_loss = jax.jit(dgi_forward)(
        features, sub_graph_adj, sub_graph_norm, node_sub_graph,
        node_list, a_norm, gcn_w, gcn_b, perm)
    jax.block_until_ready((pos_loss, neg_loss))

    # Pure-JAX f32 reference. Kernels use bf16 MXU inputs / bf16 pos-neg
    # intermediates (f32 accumulation), so tolerance is loosened accordingly.
    def ref():
        pos = jnp.maximum(a_norm @ (features @ gcn_w) + gcn_b, 0.0)
        neg = jnp.maximum(a_norm @ (features[perm] @ gcn_w) + gcn_b, 0.0)
        ge = jax.nn.sigmoid((sub_graph_adj @ pos) / sub_graph_norm)
        summ = ge[node_sub_graph]
        ps = jnp.sum(pos * summ, axis=1)
        ns = jnp.sum(neg * summ, axis=1)
        pls = jnp.maximum(ps, 0) - ps + jnp.log1p(jnp.exp(-jnp.abs(ps)))
        nls = jnp.maximum(ns, 0) + jnp.log1p(jnp.exp(-jnp.abs(ns)))
        return pls, nls

    rp, rn = ref()
    assert pos_loss.shape == (N,) and neg_loss.shape == (N,)
    assert jnp.allclose(pos_loss, rp, atol=2e-2, rtol=2e-2), \
        float(jnp.max(jnp.abs(pos_loss - rp)))
    assert jnp.allclose(neg_loss, rn, atol=2e-2, rtol=2e-2), \
        float(jnp.max(jnp.abs(neg_loss - rn)))

    print("KERNEL_OK")
</pallas_src>

<mosaic_0001>
module attributes {stable_mosaic.version = 11 : i64} {
  func.func @kernel(%arg0: i32, %arg1: i32, %arg2: memref<128x128xbf16, #tpu.memory_space<vmem>>, %arg3: memref<128x256xbf16, #tpu.memory_space<vmem>>, %arg4: memref<1x256xf32, #tpu.memory_space<vmem>>, %arg5: memref<128x256xbf16, #tpu.memory_space<vmem>>, %arg6: memref<128x256xf32, #tpu.memory_space<vmem>>) attributes {dimension_semantics = [#tpu.dimension_semantics<parallel>, #tpu.dimension_semantics<arbitrary>], iteration_bounds = array<i64: 1, 1>, scalar_prefetch = 0 : i64, scratch_operands = 1 : i64, tpu.core_type = #tpu.core_type<tc>, window_params = [{transform_indices = @transform_0, window_bounds = array<i64: 128, 128>}, {pipeline_mode = #tpu.pipeline_mode<synchronous>, transform_indices = @transform_1, window_bounds = array<i64: 128, 256>}, {pipeline_mode = #tpu.pipeline_mode<synchronous>, transform_indices = @transform_2, window_bounds = array<i64: 1, 256>}, {transform_indices = @transform_3, window_bounds = array<i64: 128, 256>}]} {
    %c0_i32 = arith.constant 0 : i32
    %0 = arith.cmpi eq, %arg1, %c0_i32 : i32
    %1 = arith.extui %0 : i1 to i32
    %c0_i32_0 = arith.constant 0 : i32
    %2 = arith.cmpi ne, %1, %c0_i32_0 : i32
    scf.if %2 {
      %cst_9 = arith.constant 0.000000e+00 : f32
      %15 = vector.broadcast %cst_9 : f32 to vector<128x256xf32>
      %c0_10 = arith.constant 0 : index
      %c0_11 = arith.constant 0 : index
      %16 = vector.load %arg6[%c0_10, %c0_11] : memref<128x256xf32, #tpu.memory_space<vmem>>, vector<128x256xf32>
      tpu.vector_store %arg6[%c0_10, %c0_11], %15 {strides = array<i32>} : memref<128x256xf32, #tpu.memory_space<vmem>>, vector<128x256xf32>,
    } else {
    }
    %c128_i32 = arith.constant 128 : i32
    %3 = arith.muli %arg1, %c128_i32 : i32
    %4 = tpu.assume_multiple %3, 128 : i32
    %5 = arith.index_cast %4 : i32 to index
    %c0 = arith.constant 0 : index
    %6 = vector.load %arg3[%5, %c0] : memref<128x256xbf16, #tpu.memory_space<vmem>>, vector<128x256xbf16>
    %c0_1 = arith.constant 0 : index
    %c0_2 = arith.constant 0 : index
    %7 = vector.load %arg6[%c0_1, %c0_2] : memref<128x256xf32, #tpu.memory_space<vmem>>, vector<128x256xf32>
    %c0_3 = arith.constant 0 : index
    %c0_4 = arith.constant 0 : index
    %8 = vector.load %arg2[%c0_3, %c0_4] : memref<128x128xbf16, #tpu.memory_space<vmem>>, vector<128x128xbf16>
    %cst = arith.constant dense<0.000000e+00> : vector<128x256xf32>
    %9 = tpu.matmul %8, %6, %cst {dimension_numbers = #tpu.dot_dimension_numbers<[1], [0], [0], [1], [0, 0, 1, 1], [], []>} : vector<128x128xbf16>, vector<128x256xbf16>, vector<128x256xf32> -> vector<128x256xf32>
    %10 = arith.addf %7, %9 : vector<128x256xf32>
    %c0_5 = arith.constant 0 : index
    %c0_6 = arith.constant 0 : index
    %11 = vector.load %arg6[%c0_5, %c0_6] : memref<128x256xf32, #tpu.memory_space<vmem>>, vector<128x256xf32>
    tpu.vector_store %arg6[%c0_5, %c0_6], %10 {strides = array<i32>} : memref<128x256xf32, #tpu.memory_space<vmem>>, vector<128x256xf32>,
    %c0_i32_7 = arith.constant 0 : i32
    %12 = arith.cmpi eq, %arg1, %c0_i32_7 : i32
    %13 = arith.extui %12 : i1 to i32
    %c0_i32_8 = arith.constant 0 : i32
    %14 = arith.cmpi ne, %13, %c0_i32_8 : i32
    scf.if %14 {
      %c0_9 = arith.constant 0 : index
      %c0_10 = arith.constant 0 : index
      %15 = vector.load %arg6[%c0_9, %c0_10] : memref<128x256xf32, #tpu.memory_space<vmem>>, vector<128x256xf32>
      %c0_11 = arith.constant 0 : index
      %c0_12 = arith.constant 0 : index
      %16 = vector.load %arg4[%c0_11, %c0_12] : memref<1x256xf32, #tpu.memory_space<vmem>>, vector<1x256xf32>
      %17 = vector.broadcast %16 : vector<1x256xf32> to vector<128x256xf32>
      %18 = arith.addf %15, %17 : vector<128x256xf32>
      %cst_13 = arith.constant 0.000000e+00 : f32
      %19 = vector.broadcast %cst_13 : f32 to vector<128x256xf32>
      %20 = arith.maximumf %18, %19 : vector<128x256xf32>
      %21 = arith.truncf %20 : vector<128x256xf32> to vector<128x256xbf16>
      %c0_14 = arith.constant 0 : index
      %c0_15 = arith.constant 0 : index
      %22 = vector.load %arg5[%c0_14, %c0_15] : memref<128x256xbf16, #tpu.memory_space<vmem>>, vector<128x256xbf16>
      tpu.vector_store %arg5[%c0_14, %c0_15], %21 {strides = array<i32>} : memref<128x256xbf16, #tpu.memory_space<vmem>>, vector<128x256xbf16>,
    } else {
    }
    return
  }
  func.func @transform_0(%arg0: i32, %arg1: i32) -> (i32, i32) {
    %c0_i32 = arith.constant 0 : i32
    return %arg0, %arg1 : i32, i32
  }
  func.func @transform_1(%arg0: i32, %arg1: i32) -> (i32, i32) {
    %c0_i32 = arith.constant 0 : i32
    %c0_i32_0 = arith.constant 0 : i32
    %c0_i32_1 = arith.constant 0 : i32
    return %c0_i32, %c0_i32_0 : i32, i32
  }
  func.func @transform_2(%arg0: i32, %arg1: i32) -> (i32, i32) {
    %c0_i32 = arith.constant 0 : i32
    %c0_i32_0 = arith.constant 0 : i32
    %c0_i32_1 = arith.constant 0 : i32
    return %c0_i32, %c0_i32_0 : i32, i32
  }
  func.func @transform_3(%arg0: i32, %arg1: i32) -> (i32, i32) {
    %c0_i32 = arith.constant 0 : i32
    %c0_i32_0 = arith.constant 0 : i32
    return %arg0, %c0_i32 : i32, i32
  }
}

module attributes {stable_mosaic.version = 11 : i64} {
  func.func @graph_emb_kernel(%arg0: i32, %arg1: memref<8x128xbf16, #tpu.memory_space<vmem>>, %arg2: memref<128x128xbf16, #tpu.memory_space<vmem>>, %arg3: memref<8x1xf32, #tpu.memory_space<vmem>>, %arg4: memref<8x128xf32, #tpu.memory_space<vmem>>) attributes {dimension_semantics = [#tpu.dimension_semantics<arbitrary>], iteration_bounds = array<i64: 1>, scalar_prefetch = 0 : i64, scratch_operands = 0 : i64, tpu.core_type = #tpu.core_type<tc>, window_params = [{transform_indices = @transform_0, window_bounds = array<i64: 8, 128>}, {transform_indices = @transform_1, window_bounds = array<i64: 128, 128>}, {pipeline_mode = #tpu.pipeline_mode<synchronous>, transform_indices = @transform_2, window_bounds = array<i64: 8, 1>}, {pipeline_mode = #tpu.pipeline_mode<synchronous>, transform_indices = @transform_3, window_bounds = array<i64: 8, 128>}]} {
    %c0_i32 = arith.constant 0 : i32
    %0 = arith.cmpi eq, %arg0, %c0_i32 : i32
    %1 = arith.extui %0 : i1 to i32
    %c0_i32_0 = arith.constant 0 : i32
    %2 = arith.cmpi ne, %1, %c0_i32_0 : i32
    scf.if %2 {
      %cst_10 = arith.constant 0.000000e+00 : f32
      %12 = vector.broadcast %cst_10 : f32 to vector<8x128xf32>
      %c0_11 = arith.constant 0 : index
      %c0_12 = arith.constant 0 : index
      %13 = vector.load %arg4[%c0_11, %c0_12] : memref<8x128xf32, #tpu.memory_space<vmem>>, vector<8x128xf32>
      tpu.vector_store %arg4[%c0_11, %c0_12], %12 {strides = array<i32>} : memref<8x128xf32, #tpu.memory_space<vmem>>, vector<8x128xf32>,
    } else {
    }
    %c0 = arith.constant 0 : index
    %c0_1 = arith.constant 0 : index
    %3 = vector.load %arg4[%c0, %c0_1] : memref<8x128xf32, #tpu.memory_space<vmem>>, vector<8x128xf32>
    %c0_2 = arith.constant 0 : index
    %c0_3 = arith.constant 0 : index
    %4 = vector.load %arg1[%c0_2, %c0_3] : memref<8x128xbf16, #tpu.memory_space<vmem>>, vector<8x128xbf16>
    %c0_4 = arith.constant 0 : index
    %c0_5 = arith.constant 0 : index
    %5 = vector.load %arg2[%c0_4, %c0_5] : memref<128x128xbf16, #tpu.memory_space<vmem>>, vector<128x128xbf16>
    %cst = arith.constant dense<0.000000e+00> : vector<8x128xf32>
    %6 = tpu.matmul %4, %5, %cst {dimension_numbers = #tpu.dot_dimension_numbers<[1], [0], [0], [1], [0, 0, 1, 1], [], []>} : vector<8x128xbf16>, vector<128x128xbf16>, vector<8x128xf32> -> vector<8x128xf32>
    %7 = arith.addf %3, %6 : vector<8x128xf32>
    %c0_6 = arith.constant 0 : index
    %c0_7 = arith.constant 0 : index
    %8 = vector.load %arg4[%c0_6, %c0_7] : memref<8x128xf32, #tpu.memory_space<vmem>>, vector<8x128xf32>
    tpu.vector_store %arg4[%c0_6, %c0_7], %7 {strides = array<i32>} : memref<8x128xf32, #tpu.memory_space<vmem>>, vector<8x128xf32>,
    %c0_i32_8 = arith.constant 0 : i32
    %9 = arith.cmpi eq, %arg0, %c0_i32_8 : i32
    %10 = arith.extui %9 : i1 to i32
    %c0_i32_9 = arith.constant 0 : i32
    %11 = arith.cmpi ne, %10, %c0_i32_9 : i32
    scf.if %11 {
      %c0_10 = arith.constant 0 : index
      %c0_11 = arith.constant 0 : index
      %12 = vector.load %arg3[%c0_10, %c0_11] : memref<8x1xf32, #tpu.memory_space<vmem>>, vector<8x1xf32>
      %13 = tpu.reciprocal %12 {approx = true} : vector<8x1xf32> -> vector<8x1xf32>
      %c0_12 = arith.constant 0 : index
      %c0_13 = arith.constant 0 : index
      %14 = vector.load %arg4[%c0_12, %c0_13] : memref<8x128xf32, #tpu.memory_space<vmem>>, vector<8x128xf32>
      %15 = vector.broadcast %13 : vector<8x1xf32> to vector<8x128xf32>
      %16 = arith.mulf %14, %15 : vector<8x128xf32>
      %17 = arith.negf %16 : vector<8x128xf32>
      %18 = math.exp %17 : vector<8x128xf32>
      %cst_14 = arith.constant 1.000000e+00 : f32
      %19 = vector.broadcast %cst_14 : f32 to vector<8x128xf32>
      %20 = arith.addf %19, %18 : vector<8x128xf32>
      %21 = arith.divf %19, %20 : vector<8x128xf32>
      %c0_15 = arith.constant 0 : index
      %c0_16 = arith.constant 0 : index
      %22 = vector.load %arg4[%c0_15, %c0_16] : memref<8x128xf32, #tpu.memory_space<vmem>>, vector<8x128xf32>
      tpu.vector_store %arg4[%c0_15, %c0_16], %21 {strides = array<i32>} : memref<8x128xf32, #tpu.memory_space<vmem>>, vector<8x128xf32>,
    } else {
    }
    return
  }
  func.func @transform_0(%arg0: i32) -> (i32, i32) {
    %c0_i32 = arith.constant 0 : i32
    %c0_i32_0 = arith.constant 0 : i32
    return %c0_i32, %arg0 : i32, i32
  }
  func.func @transform_1(%arg0: i32) -> (i32, i32) {
    %c0_i32 = arith.constant 0 : i32
    %c0_i32_0 = arith.constant 0 : i32
    return %arg0, %c0_i32 : i32, i32
  }
  func.func @transform_2(%arg0: i32) -> (i32, i32) {
    %c0_i32 = arith.constant 0 : i32
    %c0_i32_0 = arith.constant 0 : i32
    %c0_i32_1 = arith.constant 0 : i32
    return %c0_i32, %c0_i32_0 : i32, i32
  }
  func.func @transform_3(%arg0: i32) -> (i32, i32) {
    %c0_i32 = arith.constant 0 : i32
    %c0_i32_0 = arith.constant 0 : i32
    %c0_i32_1 = arith.constant 0 : i32
    return %c0_i32, %c0_i32_0 : i32, i32
  }
}

module attributes {stable_mosaic.version = 11 : i64} {
  func.func @score_loss_kernel(%arg0: i32, %arg1: memref<128x1xi32, #tpu.memory_space<vmem>>, %arg2: memref<8x128xf32, #tpu.memory_space<vmem>>, %arg3: memref<128x256xbf16, #tpu.memory_space<vmem>>, %arg4: memref<2x128xf32, #tpu.memory_space<vmem>>) attributes {dimension_semantics = [#tpu.dimension_semantics<parallel>], iteration_bounds = array<i64: 1>, scalar_prefetch = 0 : i64, scratch_operands = 0 : i64, tpu.core_type = #tpu.core_type<tc>, window_params = [{transform_indices = @transform_0, window_bounds = array<i64: 128, 1>}, {pipeline_mode = #tpu.pipeline_mode<synchronous>, transform_indices = @transform_1, window_bounds = array<i64: 8, 128>}, {transform_indices = @transform_2, window_bounds = array<i64: 128, 256>}, {transform_indices = @transform_3, window_bounds = array<i64: 2, 128>}]} {
    %c0 = arith.constant 0 : index
    %c0_0 = arith.constant 0 : index
    %0 = vector.load %arg1[%c0, %c0_0] : memref<128x1xi32, #tpu.memory_space<vmem>>, vector<128x1xi32>
    %1 = tpu.iota {dimensions = array<i32: 1>} : vector<128x8xi32>
    %2 = vector.broadcast %0 : vector<128x1xi32> to vector<128x8xi32>
    %3 = arith.cmpi eq, %2, %1 : vector<128x8xi32>
    %4 = arith.extui %3 : vector<128x8xi1> to vector<128x8xi32>
    %5 = arith.sitofp %4 : vector<128x8xi32> to vector<128x8xf32>
    %c0_1 = arith.constant 0 : index
    %c0_2 = arith.constant 0 : index
    %6 = vector.load %arg2[%c0_1, %c0_2] : memref<8x128xf32, #tpu.memory_space<vmem>>, vector<8x128xf32>
    %cst = arith.constant dense<0.000000e+00> : vector<128x128xf32>
    %7 = tpu.matmul %5, %6, %cst {dimension_numbers = #tpu.dot_dimension_numbers<[1], [0], [0], [1], [0, 0, 1, 1], [], []>} : vector<128x8xf32>, vector<8x128xf32>, vector<128x128xf32> -> vector<128x128xf32>
    %c0_3 = arith.constant 0 : index
    %c0_4 = arith.constant 0 : index
    %8 = vector.load %arg3[%c0_3, %c0_4] : memref<128x256xbf16, #tpu.memory_space<vmem>>, vector<128x256xbf16>
    %9 = arith.extf %8 : vector<128x256xbf16> to vector<128x256xf32>
    %10 = vector.extract_strided_slice %9 {offsets = [0, 0], sizes = [128, 128], strides = [1, 1]} : vector<128x256xf32> to vector<128x128xf32>
    %11 = arith.mulf %10, %7 : vector<128x128xf32>
    %12 = vector.extract_strided_slice %9 {offsets = [0, 128], sizes = [128, 128], strides = [1, 1]} : vector<128x256xf32> to vector<128x128xf32>
    %13 = arith.mulf %12, %7 : vector<128x128xf32>
    %cst_5 = arith.constant 1.000000e+00 : f32
    %14 = vector.broadcast %cst_5 : f32 to vector<1x128xf32>
    %cst_6 = arith.constant dense<0.000000e+00> : vector<1x128xf32>
    %15 = tpu.matmul %14, %11, %cst_6 {dimension_numbers = #tpu.dot_dimension_numbers<[1], [1], [0], [0], [0, 0, 1, 0], [], []>} : vector<1x128xf32>, vector<128x128xf32>, vector<1x128xf32> -> vector<1x128xf32>
    %cst_7 = arith.constant dense<0.000000e+00> : vector<1x128xf32>
    %16 = tpu.matmul %14, %13, %cst_7 {dimension_numbers = #tpu.dot_dimension_numbers<[1], [1], [0], [0], [0, 0, 1, 0], [], []>} : vector<1x128xf32>, vector<128x128xf32>, vector<1x128xf32> -> vector<1x128xf32>
    %cst_8 = arith.constant 0.000000e+00 : f32
    %17 = vector.broadcast %cst_8 : f32 to vector<1x128xf32>
    %18 = arith.subf %17, %15 : vector<1x128xf32>
    %19 = tpu.concatenate %18, %16 in 0 : vector<1x128xf32>, vector<1x128xf32> -> vector<2x128xf32>
    %cst_9 = arith.constant 0.000000e+00 : f32
    %20 = vector.broadcast %cst_9 : f32 to vector<2x128xf32>
    %21 = arith.maximumf %19, %20 : vector<2x128xf32>
    %22 = math.absf %19 : vector<2x128xf32>
    %cst_10 = arith.constant 0.000000e+00 : f32
    %23 = vector.broadcast %cst_10 : f32 to vector<2x128xf32>
    %24 = arith.subf %23, %22 : vector<2x128xf32>
    %25 = math.exp %24 : vector<2x128xf32>
    %26 = math.log1p %25 : vector<2x128xf32>
    %27 = arith.addf %21, %26 : vector<2x128xf32>
    %c0_11 = arith.constant 0 : index
    %c0_12 = arith.constant 0 : index
    %28 = vector.load %arg4[%c0_11, %c0_12] : memref<2x128xf32, #tpu.memory_space<vmem>>, vector<2x128xf32>
    tpu.vector_store %arg4[%c0_11, %c0_12], %27 {strides = array<i32>} : memref<2x128xf32, #tpu.memory_space<vmem>>, vector<2x128xf32>,
    return
  }
  func.func @transform_0(%arg0: i32) -> (i32, i32) {
    %c0_i32 = arith.constant 0 : i32
    %c0_i32_0 = arith.constant 0 : i32
    return %arg0, %c0_i32 : i32, i32
  }
  func.func @transform_1(%arg0: i32) -> (i32, i32) {
    %c0_i32 = arith.constant 0 : i32
    %c0_i32_0 = arith.constant 0 : i32
    %c0_i32_1 = arith.constant 0 : i32
    return %c0_i32, %c0_i32_0 : i32, i32
  }
  func.func @transform_2(%arg0: i32) -> (i32, i32) {
    %c0_i32 = arith.constant 0 : i32
    %c0_i32_0 = arith.constant 0 : i32
    return %arg0, %c0_i32 : i32, i32
  }
  func.func @transform_3(%arg0: i32) -> (i32, i32) {
    %c0_i32 = arith.constant 0 : i32
    %c0_i32_0 = arith.constant 0 : i32
    return %c0_i32, %arg0 : i32, i32
  }
}

</mosaic_0001>

<llo_original>
// kernel: dgi_forward.4
$region0: #{dgi_forward.4}
  #allocation0 [shape = 'u32[]', space=smem, size = 0x4, offset = 0x4, fixed_abs, tag = 'smem constant byte address 0x4 - core index']
  #allocation1 [shape = 'u32[144,128]{1,0:T(1,128)}', space=vmem, size = 0x12000, scoped, tag = 'internal scratch']
  %s0 = inlined_call_operand.vmem [shape: bf16[8,128], index: 0, kind: input, shape index: {}]
  %s1 = inlined_call_operand.vmem [shape: bf16[128,256], index: 1, kind: input, shape index: {}]
  %s2 = inlined_call_operand.vmem [shape: f32[8,1], index: 2, kind: input, shape index: {}]
  %s3 = inlined_call_operand.vmem [shape: f32[8,128], index: 3, kind: output, shape index: {}]
  %s4 = sld [smem:[#allocation0]]
  $region71: #{dgi_forward.4} parent=0
    _
  %s6 = ssub.s32 1, %s4
  %s7 = scalar_select 0, %s6, %s4
  $region1: #{dgi_forward.4} parent=0
    #allocation2 [shape = 'u8[32768]{0}', space=vmem, size = 0x8000, scoped, tag = 'input window, operand 1, single buffered']
    // Predicated region
    $region2: #{dgi_forward.4} parent=1 // pred_check
      _
    $region3: #{dgi_forward.4} parent=1 // pred_check_branch
      %9 = sbr.rel (0) target = $region5
    $region4: #{dgi_forward.4} parent=1 // pred_region
      _
    $region5: #{dgi_forward.4} parent=1 // pred_fallthru
      _
    // Predicated region
    $region6: #{dgi_forward.4} parent=1 // pred_check
      _
    $region7: #{dgi_forward.4} parent=1 // pred_check_branch
      %11 = sbr.rel (0) target = $region9
    $region8: #{dgi_forward.4} parent=1 // pred_region
      // Predicated region
      $region10: #{dgi_forward.4} parent=8 // pred_check
        _
      $region11: #{dgi_forward.4} parent=8 // pred_check_branch
        %13 = sbr.rel (0) target = $region13
      $region12: #{dgi_forward.4} parent=8 // pred_region
        // Predicated region
        $region14: #{dgi_forward.4} parent=12 // pred_check
          _
        $region15: #{dgi_forward.4} parent=12 // pred_check_branch
          %15 = sbr.rel target = $region17
        $region16: #{dgi_forward.4} parent=12 // pred_region
          // Predicated region
          $region29: #{dgi_forward.4} parent=16 // pred_check
            _
          $region30: #{dgi_forward.4} parent=16 // pred_check_branch
            %60 = sbr.rel (0) target = $region32
          $region31: #{dgi_forward.4} parent=16 // pred_region
            loop: start=0, step=1, limit=1
            $region33: #{dgi_forward.4} parent=31 // loop_pre_header
              _
            $region34: #{dgi_forward.4} parent=31 // loop_header
              %s62 = sphi 0, %s66
              %p63 = scmp.ge.s32.totalorder %s62, 1
              %s67 = sphi %s1, %s1
              %s68 = sphi [#allocation2], [#allocation2]
            $region35: #{dgi_forward.4} parent=31 // loop_header_branch
              %65 = sbr.rel (%p63) target = $region39
            $region36: #{dgi_forward.4} parent=31 // loop_body
              _
            $region37: #{dgi_forward.4} parent=31 // loop_footer
              %s66 = sadd.s32 1, %s62
            $region38: #{dgi_forward.4} parent=31 // loop_footer_branch
              %61 = sbr.rel target = $region34
            $region39: #{dgi_forward.4} parent=31 // loop_exit
              _
            loop: start=0, step=1, limit=1
            $region40: #{dgi_forward.4} parent=31 // loop_pre_header
              _
            $region41: #{dgi_forward.4} parent=31 // loop_header
              %s71 = sphi 0, %s75
              %p72 = scmp.ge.s32.totalorder %s71, 1
              %s76 = sphi %s1, %s1
              %s77 = sphi [#allocation2], [#allocation2]
            $region42: #{dgi_forward.4} parent=31 // loop_header_branch
              %74 = sbr.rel (%p72) target = $region46
            $region43: #{dgi_forward.4} parent=31 // loop_body
              %v78 = vld [vmem:[%s76] sm:$0xf]
              %79 = vst [vmem:[%s77] sm:$0xf] %v78
              %v80 = vld [vmem:[%s76 + $0x8] sm:$0xf]
              %81 = vst [vmem:[%s77 + $0x4] sm:$0xf] %v80
              %v82 = vld [vmem:[%s76 + $0x10] sm:$0xf]
              %83 = vst [vmem:[%s77 + $0x8] sm:$0xf] %v82
              %v84 = vld [vmem:[%s76 + $0x18] sm:$0xf]
              %85 = vst [vmem:[%s77 + $0xc] sm:$0xf] %v84
              %v86 = vld [vmem:[%s76 + $0x20] sm:$0xf]
              %87 = vst [vmem:[%s77 + $0x10] sm:$0xf] %v86
              %v88 = vld [vmem:[%s76 + $0x28] sm:$0xf]
              %89 = vst [vmem:[%s77 + $0x14] sm:$0xf] %v88
              %v90 = vld [vmem:[%s76 + $0x30] sm:$0xf]
              %91 = vst [vmem:[%s77 + $0x18] sm:$0xf] %v90
              %v92 = vld [vmem:[%s76 + $0x38] sm:$0xf]
              %93 = vst [vmem:[%s77 + $0x1c] sm:$0xf] %v92
              %v94 = vld [vmem:[%s76 + $0x40] sm:$0xf]
              %95 = vst [vmem:[%s77 + $0x20] sm:$0xf] %v94
              %v96 = vld [vmem:[%s76 + $0x48] sm:$0xf]
              %97 = vst [vmem:[%s77 + $0x24] sm:$0xf] %v96
              %v98 = vld [vmem:[%s76 + $0x50] sm:$0xf]
              %99 = vst [vmem:[%s77 + $0x28] sm:$0xf] %v98
              %v100 = vld [vmem:[%s76 + $0x58] sm:$0xf]
              %101 = vst [vmem:[%s77 + $0x2c] sm:$0xf] %v100
              %v102 = vld [vmem:[%s76 + $0x60] sm:$0xf]
              %103 = vst [vmem:[%s77 + $0x30] sm:$0xf] %v102
              %v104 = vld [vmem:[%s76 + $0x68] sm:$0xf]
              %105 = vst [vmem:[%s77 + $0x34] sm:$0xf] %v104
              %v106 = vld [vmem:[%s76 + $0x70] sm:$0xf]
              %107 = vst [vmem:[%s77 + $0x38] sm:$0xf] %v106
              %v108 = vld [vmem:[%s76 + $0x78] sm:$0xf]
              %109 = vst [vmem:[%s77 + $0x3c] sm:$0xf] %v108
            $region44: #{dgi_forward.4} parent=31 // loop_footer
              %s75 = sadd.s32 1, %s71
            $region45: #{dgi_forward.4} parent=31 // loop_footer_branch
              %70 = sbr.rel target = $region41
            $region46: #{dgi_forward.4} parent=31 // loop_exit
              _
          $region32: #{dgi_forward.4} parent=16 // pred_fallthru
            _
        $region17: #{dgi_forward.4} parent=12 // pred_fallthru
          _
        // Predicated region
        $region18: #{dgi_forward.4} parent=12 // pred_check
          _
        $region19: #{dgi_forward.4} parent=12 // pred_check_branch
          %17 = sbr.rel (0) target = $region21
        $region20: #{dgi_forward.4} parent=12 // pred_region
          loop: start=0, step=1, limit=1
          $region22: #{dgi_forward.4} parent=20 // loop_pre_header
            _
          $region23: #{dgi_forward.4} parent=20 // loop_header
            %s20 = sphi 0, %s24
            %p21 = scmp.ge.s32.totalorder %s20, 1
            %s25 = sphi %s1, %s1
            %s26 = sphi [#allocation2], [#allocation2]
          $region24: #{dgi_forward.4} parent=20 // loop_header_branch
            %23 = sbr.rel (%p21) target = $region28
          $region25: #{dgi_forward.4} parent=20 // loop_body
            %v27 = vld [vmem:[%s25] sm:$0xf]
            %28 = vst [vmem:[%s26] sm:$0xf] %v27
            %v29 = vld [vmem:[%s25 + $0x8] sm:$0xf]
            %30 = vst [vmem:[%s26 + $0x4] sm:$0xf] %v29
            %v31 = vld [vmem:[%s25 + $0x10] sm:$0xf]
            %32 = vst [vmem:[%s26 + $0x8] sm:$0xf] %v31
            %v33 = vld [vmem:[%s25 + $0x18] sm:$0xf]
            %34 = vst [vmem:[%s26 + $0xc] sm:$0xf] %v33
            %v35 = vld [vmem:[%s25 + $0x20] sm:$0xf]
            %36 = vst [vmem:[%s26 + $0x10] sm:$0xf] %v35
            %v37 = vld [vmem:[%s25 + $0x28] sm:$0xf]
            %38 = vst [vmem:[%s26 + $0x14] sm:$0xf] %v37
            %v39 = vld [vmem:[%s25 + $0x30] sm:$0xf]
            %40 = vst [vmem:[%s26 + $0x18] sm:$0xf] %v39
            %v41 = vld [vmem:[%s25 + $0x38] sm:$0xf]
            %42 = vst [vmem:[%s26 + $0x1c] sm:$0xf] %v41
            %v43 = vld [vmem:[%s25 + $0x40] sm:$0xf]
            %44 = vst [vmem:[%s26 + $0x20] sm:$0xf] %v43
            %v45 = vld [vmem:[%s25 + $0x48] sm:$0xf]
            %46 = vst [vmem:[%s26 + $0x24] sm:$0xf] %v45
            %v47 = vld [vmem:[%s25 + $0x50] sm:$0xf]
            %48 = vst [vmem:[%s26 + $0x28] sm:$0xf] %v47
            %v49 = vld [vmem:[%s25 + $0x58] sm:$0xf]
            %50 = vst [vmem:[%s26 + $0x2c] sm:$0xf] %v49
            %v51 = vld [vmem:[%s25 + $0x60] sm:$0xf]
            %52 = vst [vmem:[%s26 + $0x30] sm:$0xf] %v51
            %v53 = vld [vmem:[%s25 + $0x68] sm:$0xf]
            %54 = vst [vmem:[%s26 + $0x34] sm:$0xf] %v53
            %v55 = vld [vmem:[%s25 + $0x70] sm:$0xf]
            %56 = vst [vmem:[%s26 + $0x38] sm:$0xf] %v55
            %v57 = vld [vmem:[%s25 + $0x78] sm:$0xf]
            %58 = vst [vmem:[%s26 + $0x3c] sm:$0xf] %v57
          $region26: #{dgi_forward.4} parent=20 // loop_footer
            %s24 = sadd.s32 1, %s20
          $region27: #{dgi_forward.4} parent=20 // loop_footer_branch
            %19 = sbr.rel target = $region23
          $region28: #{dgi_forward.4} parent=20 // loop_exit
            _
        $region21: #{dgi_forward.4} parent=12 // pred_fallthru
          _
      $region13: #{dgi_forward.4} parent=8 // pred_fallthru
        _
      %110 = vnop
    $region9: #{dgi_forward.4} parent=1 // pred_fallthru
      _
    // Predicated region
    $region47: #{dgi_forward.4} parent=1 // pred_check
      _
    $region48: #{dgi_forward.4} parent=1 // pred_check_branch
      %112 = sbr.rel (0) target = $region50
    $region49: #{dgi_forward.4} parent=1 // pred_region
      _
    $region50: #{dgi_forward.4} parent=1 // pred_fallthru
      _
    // Predicated region
    $region51: #{dgi_forward.4} parent=1 // pred_check
      _
    $region52: #{dgi_forward.4} parent=1 // pred_check_branch
      %114 = sbr.rel (0) target = $region54
    $region53: #{dgi_forward.4} parent=1 // pred_region
      _
    $region54: #{dgi_forward.4} parent=1 // pred_fallthru
      _
    %p116 = scmp.eq.s32.totalorder 0, 0
    // Predicated region
    $region55: #{dgi_forward.4} parent=1 // pred_check
      %p117 = pneg %p116
    $region56: #{dgi_forward.4} parent=1 // pred_check_branch
      %119 = sbr.rel (%p117) target = $region58
    $region57: #{dgi_forward.4} parent=1 // pred_region
      %120 = vst [vmem:[%s3] sm:$0xff] 0.0
    $region58: #{dgi_forward.4} parent=1 // pred_fallthru
      _
    %v121 = vld [vmem:[%s3] sm:$0xff]
    %v122 = vld [vmem:[%s0] sm:$0xf]
    %v123 = vld [vmem:[#allocation2] sm:$0xf]
    %v124 = vld [vmem:[#allocation2 + $0x4] sm:$0xf]
    %v125 = vld [vmem:[#allocation2 + $0x8] sm:$0xf]
    %v126 = vld [vmem:[#allocation2 + $0xc] sm:$0xf]
    %v127 = vld [vmem:[#allocation2 + $0x10] sm:$0xf]
    %v128 = vld [vmem:[#allocation2 + $0x14] sm:$0xf]
    %v129 = vld [vmem:[#allocation2 + $0x18] sm:$0xf]
    %v130 = vld [vmem:[#allocation2 + $0x1c] sm:$0xf]
    %v131 = vld [vmem:[#allocation2 + $0x20] sm:$0xf]
    %v132 = vld [vmem:[#allocation2 + $0x24] sm:$0xf]
    %v133 = vld [vmem:[#allocation2 + $0x28] sm:$0xf]
    %v134 = vld [vmem:[#allocation2 + $0x2c] sm:$0xf]
    %v135 = vld [vmem:[#allocation2 + $0x30] sm:$0xf]
    %v136 = vld [vmem:[#allocation2 + $0x34] sm:$0xf]
    %v137 = vld [vmem:[#allocation2 + $0x38] sm:$0xf]
    %v138 = vld [vmem:[#allocation2 + $0x3c] sm:$0xf]
    %v155 = vunpack.c.l.b16 %v123
    %v156 = vunpack.c.l.b16 %v124
    %v157 = vunpack.c.l.b16 %v125
    %v158 = vunpack.c.l.b16 %v126
    %v159 = vunpack.c.l.b16 %v127
    %v160 = vunpack.c.l.b16 %v128
    %v161 = vunpack.c.l.b16 %v129
    %v162 = vunpack.c.l.b16 %v130
    %v163 = vunpack.c.l.b16 %v131
    %v164 = vunpack.c.l.b16 %v132
    %v165 = vunpack.c.l.b16 %v133
    %v166 = vunpack.c.l.b16 %v134
    %v167 = vunpack.c.l.b16 %v135
    %v168 = vunpack.c.l.b16 %v136
    %v169 = vunpack.c.l.b16 %v137
    %v170 = vunpack.c.l.b16 %v138
    %v171 = vpack.c.b16 %v156, %v155
    %v172 = vpack.c.b16 %v158, %v157
    %v173 = vpack.c.b16 %v160, %v159
    %v174 = vpack.c.b16 %v162, %v161
    %v175 = vpack.c.b16 %v164, %v163
    %v176 = vpack.c.b16 %v166, %v165
    %v177 = vpack.c.b16 %v168, %v167
    %v178 = vpack.c.b16 %v170, %v169
    %187 = vmatprep.subr.bf16.mxu0 0
    %188 = vmatpush1.bf16.msra.mxu0 %v171
    %189 = vmatprep.subr.bf16.mxu0 0
    %190 = vmatpush1.bf16.msra.mxu0 %v172
    %191 = vmatprep.subr.bf16.mxu0 0
    %192 = vmatpush1.bf16.msra.mxu0 %v173
    %193 = vmatprep.subr.bf16.mxu0 0
    %194 = vmatpush1.bf16.msra.mxu0 %v174
    %195 = vmatprep.subr.bf16.mxu0 0
    %196 = vmatpush1.bf16.msra.mxu0 %v175
    %197 = vmatprep.subr.bf16.mxu0 0
    %198 = vmatpush1.bf16.msra.mxu0 %v176
    %199 = vmatprep.subr.bf16.mxu0 0
    %200 = vmatpush1.bf16.msra.mxu0 %v177
    %201 = vmatprep.subr.bf16.mxu0 0
    %202 = vmatpush1.bf16.msra.mxu0 %v178
    %203 = vmatprep.subr.bf16.mxu0 0
    %204 = vmatpush1.bf16.msra.mxu0 0
    %205 = vmatprep.subr.bf16.mxu0 0
    %206 = vmatpush1.bf16.msra.mxu0 0
    %207 = vmatprep.subr.bf16.mxu0 0
    %208 = vmatpush1.bf16.msra.mxu0 0
    %209 = vmatprep.subr.bf16.mxu0 0
    %210 = vmatpush1.bf16.msra.mxu0 0
    %211 = vmatprep.subr.bf16.mxu0 0
    %212 = vmatpush1.bf16.msra.mxu0 0
    %213 = vmatprep.subr.bf16.mxu0 0
    %214 = vmatpush1.bf16.msra.mxu0 0
    %215 = vmatprep.subr.bf16.mxu0 0
    %216 = vmatpush1.bf16.msra.mxu0 0
    %217 = vmatprep.subr.bf16.mxu0 0
    %218 = vmatpush1.bf16.msra.mxu0 0
    %219 = vmatprep.mubr.bf16.mxu0 0
    %220 = vmatmul.mubr.bf16.gmra.mrb[0].mxu0 %v122
    %v221 = vpop.f32.mrb[0].mxu0
    %v222 = vadd.f32 0.0, %v221
    %v223 = vpop.f32.mrb[0].mxu0
    %v224 = vpop.f32.mrb[0].mxu0
    %v225 = vpop.f32.mrb[0].mxu0
    %226 = vdwg.mxu0
    %v227 = vadd.f32 %v121, %v222
    %228 = vst [vmem:[%s3] sm:$0xff] %v227
    // Predicated region
    $region59: #{dgi_forward.4} parent=1 // pred_check
      %p229 = pneg %p116
    $region60: #{dgi_forward.4} parent=1 // pred_check_branch
      %231 = sbr.rel (%p229) target = $region62
    $region61: #{dgi_forward.4} parent=1 // pred_region
      %v232 = vld [vmem:[%s2] sm:$0xff]
      %v233 = vrcp.pop %v232
      %v234 = vld [vmem:[%s3] sm:$0xff]
      %236 = vset.pattern.permute.xlu0 0
      %237 = vperm.xlu0 %236, %v233
      %v238 = vpop.permute.xlu0 %237
      %v240 = vmul.f32 %v234, %v238
      %v241 = vxor.u32 %v240, 2147483648
      %v242 = vmul.f32 %v241, 1.442695
      %v243 = vpow.pop %v242
      %v244 = vadd.f32 %v243, 1.0
      %v245 = vrcp.pop %v244
      %v246 = vmul.f32 1.0, %v245
      %247 = vst [vmem:[%s3] sm:$0xff] %v246
    $region62: #{dgi_forward.4} parent=1 // pred_fallthru
      _
    // Predicated region
    $region63: #{dgi_forward.4} parent=1 // pred_check
      _
    $region64: #{dgi_forward.4} parent=1 // pred_check_branch
      %249 = sbr.rel (0) target = $region66
    $region65: #{dgi_forward.4} parent=1 // pred_region
      _
    $region66: #{dgi_forward.4} parent=1 // pred_fallthru
      _
    // Predicated region
    $region67: #{dgi_forward.4} parent=1 // pred_check
      _
    $region68: #{dgi_forward.4} parent=1 // pred_check_branch
      %251 = sbr.rel (0) target = $region70
    $region69: #{dgi_forward.4} parent=1 // pred_region
      _
    $region70: #{dgi_forward.4} parent=1 // pred_fallthru
      _

// kernel: dgi_forward.3
$region0: #{dgi_forward.3}
  #allocation0 [shape = 'u32[]', space=smem, size = 0x4, offset = 0x4, fixed_abs, tag = 'smem constant byte address 0x4 - core index']
  #allocation1 [shape = 'u32[144,128]{1,0:T(1,128)}', space=vmem, size = 0x12000, scoped, tag = 'internal scratch']
  #allocation2 [shape = 'f32[128,256]{1,0:T(8,128)}', space=vmem, size = 0x20000, scoped, tag = 'scratch operand']
  %s0 = inlined_call_operand.vmem [shape: bf16[128,128], index: 0, kind: input, shape index: {}]
  %s1 = inlined_call_operand.vmem [shape: bf16[128,256], index: 1, kind: input, shape index: {}]
  %s2 = inlined_call_operand.vmem [shape: f32[1,256], index: 2, kind: input, shape index: {}]
  %s3 = inlined_call_operand.vmem [shape: bf16[128,256], index: 3, kind: output, shape index: {}]
  %s4 = sld [smem:[#allocation0]]
  $region30: #{dgi_forward.3} parent=0
    _
  %s6 = ssub.s32 1, %s4
  %s7 = scalar_select 0, %s6, %s4
  // Predicated region
  $region2: #{dgi_forward.3} parent=0 // pred_check
    _
  $region3: #{dgi_forward.3} parent=0 // pred_check_branch
    %9 = sbr.rel (0) target = $region5
  $region4: #{dgi_forward.3} parent=0 // pred_region
    _
  $region5: #{dgi_forward.3} parent=0 // pred_fallthru
    _
  // Predicated region
  $region6: #{dgi_forward.3} parent=0 // pred_check
    _
  $region7: #{dgi_forward.3} parent=0 // pred_check_branch
    %11 = sbr.rel (0) target = $region9
  $region8: #{dgi_forward.3} parent=0 // pred_region
    _
  $region9: #{dgi_forward.3} parent=0 // pred_fallthru
    _
  // Predicated region
  $region10: #{dgi_forward.3} parent=0 // pred_check
    _
  $region11: #{dgi_forward.3} parent=0 // pred_check_branch
    %13 = sbr.rel (0) target = $region13
  $region12: #{dgi_forward.3} parent=0 // pred_region
    _
  $region13: #{dgi_forward.3} parent=0 // pred_fallthru
    _
  %p15 = scmp.eq.s32.totalorder 0, 0
  // Predicated region
  $region14: #{dgi_forward.3} parent=0 // pred_check
    %p16 = pneg %p15
  $region15: #{dgi_forward.3} parent=0 // pred_check_branch
    %18 = sbr.rel (%p16) target = $region17
  $region16: #{dgi_forward.3} parent=0 // pred_region
    %19 = vst [vmem:[#allocation2] sm:$0xff] 0.0
    %20 = vst [vmem:[#allocation2 + $0x8] sm:$0xff] 0.0
    %21 = vst [vmem:[#allocation2 + $0x10] sm:$0xff] 0.0
    %22 = vst [vmem:[#allocation2 + $0x18] sm:$0xff] 0.0
    %23 = vst [vmem:[#allocation2 + $0x20] sm:$0xff] 0.0
    %24 = vst [vmem:[#allocation2 + $0x28] sm:$0xff] 0.0
    %25 = vst [vmem:[#allocation2 + $0x30] sm:$0xff] 0.0
    %26 = vst [vmem:[#allocation2 + $0x38] sm:$0xff] 0.0
    %27 = vst [vmem:[#allocation2 + $0x40] sm:$0xff] 0.0
    %28 = vst [vmem:[#allocation2 + $0x48] sm:$0xff] 0.0
    %29 = vst [vmem:[#allocation2 + $0x50] sm:$0xff] 0.0
    %30 = vst [vmem:[#allocation2 + $0x58] sm:$0xff] 0.0
    %31 = vst [vmem:[#allocation2 + $0x60] sm:$0xff] 0.0
    %32 = vst [vmem:[#allocation2 + $0x68] sm:$0xff] 0.0
    %33 = vst [vmem:[#allocation2 + $0x70] sm:$0xff] 0.0
    %34 = vst [vmem:[#allocation2 + $0x78] sm:$0xff] 0.0
    %35 = vst [vmem:[#allocation2 + $0x80] sm:$0xff] 0.0
    %36 = vst [vmem:[#allocation2 + $0x88] sm:$0xff] 0.0
    %37 = vst [vmem:[#allocation2 + $0x90] sm:$0xff] 0.0
    %38 = vst [vmem:[#allocation2 + $0x98] sm:$0xff] 0.0
    %39 = vst [vmem:[#allocation2 + $0xa0] sm:$0xff] 0.0
    %40 = vst [vmem:[#allocation2 + $0xa8] sm:$0xff] 0.0
    %41 = vst [vmem:[#allocation2 + $0xb0] sm:$0xff] 0.0
    %42 = vst [vmem:[#allocation2 + $0xb8] sm:$0xff] 0.0
    %43 = vst [vmem:[#allocation2 + $0xc0] sm:$0xff] 0.0
    %44 = vst [vmem:[#allocation2 + $0xc8] sm:$0xff] 0.0
    %45 = vst [vmem:[#allocation2 + $0xd0] sm:$0xff] 0.0
    %46 = vst [vmem:[#allocation2 + $0xd8] sm:$0xff] 0.0
    %47 = vst [vmem:[#allocation2 + $0xe0] sm:$0xff] 0.0
    %48 = vst [vmem:[#allocation2 + $0xe8] sm:$0xff] 0.0
    %49 = vst [vmem:[#allocation2 + $0xf0] sm:$0xff] 0.0
    %50 = vst [vmem:[#allocation2 + $0xf8] sm:$0xff] 0.0
  $region17: #{dgi_forward.3} parent=0 // pred_fallthru
    _
  %s51 = smul.u32 0, 128
  %s52 = sshra.s32 %s51, 3
  %s53 = sand.u32 %s51, 7
  %s54 = smul.u32 %s52, 2
  %s55 = smul.addr %s54, 4
  %s56 = scalar_lea.vmem %s1, %s55
  %v57 = vld [vmem:[%s56] sm:$0xff]
  %v58 = vld [vmem:[%s56 + $0x8] sm:$0xff]
  %v59 = vld [vmem:[%s56 + $0x10] sm:$0xff]
  %v60 = vld [vmem:[%s56 + $0x18] sm:$0xff]
  %v61 = vld [vmem:[%s56 + $0x20] sm:$0xff]
  %v62 = vld [vmem:[%s56 + $0x28] sm:$0xff]
  %v63 = vld [vmem:[%s56 + $0x30] sm:$0xff]
  %v64 = vld [vmem:[%s56 + $0x38] sm:$0xff]
  %v65 = vld [vmem:[%s56 + $0x40] sm:$0xff]
  %v66 = vld [vmem:[%s56 + $0x48] sm:$0xff]
  %v67 = vld [vmem:[%s56 + $0x50] sm:$0xff]
  %v68 = vld [vmem:[%s56 + $0x58] sm:$0xff]
  %v69 = vld [vmem:[%s56 + $0x60] sm:$0xff]
  %v70 = vld [vmem:[%s56 + $0x68] sm:$0xff]
  %v71 = vld [vmem:[%s56 + $0x70] sm:$0xff]
  %v72 = vld [vmem:[%s56 + $0x78] sm:$0xff]
  %v73 = vld [vmem:[#allocation2] sm:$0xff]
  %v74 = vld [vmem:[#allocation2 + $0x8] sm:$0xff]
  %v75 = vld [vmem:[#allocation2 + $0x10] sm:$0xff]
  %v76 = vld [vmem:[#allocation2 + $0x18] sm:$0xff]
  %v77 = vld [vmem:[#allocation2 + $0x20] sm:$0xff]
  %v78 = vld [vmem:[#allocation2 + $0x28] sm:$0xff]
  %v79 = vld [vmem:[#allocation2 + $0x30] sm:$0xff]
  %v80 = vld [vmem:[#allocation2 + $0x38] sm:$0xff]
  %v81 = vld [vmem:[#allocation2 + $0x40] sm:$0xff]
  %v82 = vld [vmem:[#allocation2 + $0x48] sm:$0xff]
  %v83 = vld [vmem:[#allocation2 + $0x50] sm:$0xff]
  %v84 = vld [vmem:[#allocation2 + $0x58] sm:$0xff]
  %v85 = vld [vmem:[#allocation2 + $0x60] sm:$0xff]
  %v86 = vld [vmem:[#allocation2 + $0x68] sm:$0xff]
  %v87 = vld [vmem:[#allocation2 + $0x70] sm:$0xff]
  %v88 = vld [vmem:[#allocation2 + $0x78] sm:$0xff]
  %v89 = vld [vmem:[#allocation2 + $0x80] sm:$0xff]
  %v90 = vld [vmem:[#allocation2 + $0x88] sm:$0xff]
  %v91 = vld [vmem:[#allocation2 + $0x90] sm:$0xff]
  %v92 = vld [vmem:[#allocation2 + $0x98] sm:$0xff]
  %v93 = vld [vmem:[#allocation2 + $0xa0] sm:$0xff]
  %v94 = vld [vmem:[#allocation2 + $0xa8] sm:$0xff]
  %v95 = vld [vmem:[#allocation2 + $0xb0] sm:$0xff]
  %v96 = vld [vmem:[#allocation2 + $0xb8] sm:$0xff]
  %v97 = vld [vmem:[#allocation2 + $0xc0] sm:$0xff]
  %v98 = vld [vmem:[#allocation2 + $0xc8] sm:$0xff]
  %v99 = vld [vmem:[#allocation2 + $0xd0] sm:$0xff]
  %v100 = vld [vmem:[#allocation2 + $0xd8] sm:$0xff]
  %v101 = vld [vmem:[#allocation2 + $0xe0] sm:$0xff]
  %v102 = vld [vmem:[#allocation2 + $0xe8] sm:$0xff]
  %v103 = vld [vmem:[#allocation2 + $0xf0] sm:$0xff]
  %v104 = vld [vmem:[#allocation2 + $0xf8] sm:$0xff]
  %v105 = vld [vmem:[%s0] sm:$0xf]
  %v106 = vld [vmem:[%s0 + $0x4] sm:$0xf]
  %v107 = vld [vmem:[%s0 + $0x8] sm:$0xf]
  %v108 = vld [vmem:[%s0 + $0xc] sm:$0xf]
  %v109 = vld [vmem:[%s0 + $0x10] sm:$0xf]
  %v110 = vld [vmem:[%s0 + $0x14] sm:$0xf]
  %v111 = vld [vmem:[%s0 + $0x18] sm:$0xf]
  %v112 = vld [vmem:[%s0 + $0x1c] sm:$0xf]
  %v113 = vld [vmem:[%s0 + $0x20] sm:$0xf]
  %v114 = vld [vmem:[%s0 + $0x24] sm:$0xf]
  %v115 = vld [vmem:[%s0 + $0x28] sm:$0xf]
  %v116 = vld [vmem:[%s0 + $0x2c] sm:$0xf]
  %v117 = vld [vmem:[%s0 + $0x30] sm:$0xf]
  %v118 = vld [vmem:[%s0 + $0x34] sm:$0xf]
  %v119 = vld [vmem:[%s0 + $0x38] sm:$0xf]
  %v120 = vld [vmem:[%s0 + $0x3c] sm:$0xf]
  %v137 = vunpack.c.l.b16 %v105
  %v138 = vunpack.c.l.b16 %v106
  %v139 = vunpack.c.l.b16 %v107
  %v140 = vunpack.c.l.b16 %v108
  %v141 = vunpack.c.l.b16 %v109
  %v142 = vunpack.c.l.b16 %v110
  %v143 = vunpack.c.l.b16 %v111
  %v144 = vunpack.c.l.b16 %v112
  %v145 = vunpack.c.l.b16 %v113
  %v146 = vunpack.c.l.b16 %v114
  %v147 = vunpack.c.l.b16 %v115
  %v148 = vunpack.c.l.b16 %v116
  %v149 = vunpack.c.l.b16 %v117
  %v150 = vunpack.c.l.b16 %v118
  %v151 = vunpack.c.l.b16 %v119
  %v152 = vunpack.c.l.b16 %v120
  %v153 = vpack.c.b16 %v138, %v137
  %v154 = vpack.c.b16 %v140, %v139
  %v155 = vpack.c.b16 %v142, %v141
  %v156 = vpack.c.b16 %v144, %v143
  %v157 = vpack.c.b16 %v146, %v145
  %v158 = vpack.c.b16 %v148, %v147
  %v159 = vpack.c.b16 %v150, %v149
  %v160 = vpack.c.b16 %v152, %v151
  %v185 = vunpack.c.l.b16 %v57
  %v186 = vunpack.c.h.b16 %v57
  %v187 = vunpack.c.l.b16 %v58
  %v188 = vunpack.c.h.b16 %v58
  %v189 = vunpack.c.l.b16 %v59
  %v190 = vunpack.c.h.b16 %v59
  %v191 = vunpack.c.l.b16 %v60
  %v192 = vunpack.c.h.b16 %v60
  %v193 = vunpack.c.l.b16 %v61
  %v194 = vunpack.c.h.b16 %v61
  %v195 = vunpack.c.l.b16 %v62
  %v196 = vunpack.c.h.b16 %v62
  %v197 = vunpack.c.l.b16 %v63
  %v198 = vunpack.c.h.b16 %v63
  %v199 = vunpack.c.l.b16 %v64
  %v200 = vunpack.c.h.b16 %v64
  %v201 = vunpack.c.l.b16 %v65
  %v202 = vunpack.c.h.b16 %v65
  %v203 = vunpack.c.l.b16 %v66
  %v204 = vunpack.c.h.b16 %v66
  %v205 = vunpack.c.l.b16 %v67
  %v206 = vunpack.c.h.b16 %v67
  %v207 = vunpack.c.l.b16 %v68
  %v208 = vunpack.c.h.b16 %v68
  %v209 = vunpack.c.l.b16 %v69
  %v210 = vunpack.c.h.b16 %v69
  %v211 = vunpack.c.l.b16 %v70
  %v212 = vunpack.c.h.b16 %v70
  %v213 = vunpack.c.l.b16 %v71
  %v214 = vunpack.c.h.b16 %v71
  %v215 = vunpack.c.l.b16 %v72
  %v216 = vunpack.c.h.b16 %v72
  %v217 = vpack.c.b16 %v187, %v185
  %v218 = vpack.c.b16 %v188, %v186
  %v219 = vpack.c.b16 %v191, %v189
  %v220 = vpack.c.b16 %v192, %v190
  %v221 = vpack.c.b16 %v195, %v193
  %v222 = vpack.c.b16 %v196, %v194
  %v223 = vpack.c.b16 %v199, %v197
  %v224 = vpack.c.b16 %v200, %v198
  %v225 = vpack.c.b16 %v203, %v201
  %v226 = vpack.c.b16 %v204, %v202
  %v227 = vpack.c.b16 %v207, %v205
  %v228 = vpack.c.b16 %v208, %v206
  %v229 = vpack.c.b16 %v211, %v209
  %v230 = vpack.c.b16 %v212, %v210
  %v231 = vpack.c.b16 %v215, %v213
  %v232 = vpack.c.b16 %v216, %v214
  %249 = vmatprep.subr.bf16.mxu0 %v218
  %250 = vmatpush1.bf16.msra.mxu0 %v217
  %251 = vmatprep.subr.bf16.mxu0 %v220
  %252 = vmatpush1.bf16.msra.mxu0 %v219
  %253 = vmatprep.subr.bf16.mxu0 %v222
  %254 = vmatpush1.bf16.msra.mxu0 %v221
  %255 = vmatprep.subr.bf16.mxu0 %v224
  %256 = vmatpush1.bf16.msra.mxu0 %v223
  %257 = vmatprep.subr.bf16.mxu0 %v226
  %258 = vmatpush1.bf16.msra.mxu0 %v225
  %259 = vmatprep.subr.bf16.mxu0 %v228
  %260 = vmatpush1.bf16.msra.mxu0 %v227
  %261 = vmatprep.subr.bf16.mxu0 %v230
  %262 = vmatpush1.bf16.msra.mxu0 %v229
  %263 = vmatprep.subr.bf16.mxu0 %v232
  %264 = vmatpush1.bf16.msra.mxu0 %v231
  %265 = vmatprep.subr.bf16.mxu0 0
  %266 = vmatpush1.bf16.msra.mxu0 0
  %267 = vmatprep.subr.bf16.mxu0 0
  %268 = vmatpush1.bf16.msra.mxu0 0
  %269 = vmatprep.subr.bf16.mxu0 0
  %270 = vmatpush1.bf16.msra.mxu0 0
  %271 = vmatprep.subr.bf16.mxu0 0
  %272 = vmatpush1.bf16.msra.mxu0 0
  %273 = vmatprep.subr.bf16.mxu0 0
  %274 = vmatpush1.bf16.msra.mxu0 0
  %275 = vmatprep.subr.bf16.mxu0 0
  %276 = vmatpush1.bf16.msra.mxu0 0
  %277 = vmatprep.subr.bf16.mxu0 0
  %278 = vmatpush1.bf16.msra.mxu0 0
  %279 = vmatprep.subr.bf16.mxu0 0
  %280 = vmatpush1.bf16.msra.mxu0 0
  %281 = vmatprep.mubr.bf16.mxu0 0
  %282 = vmatmul.mubr.bf16.gmra.mrb[0].mxu0 %v153
  %v283 = vpop.f32.mrb[0].mxu0
  %v284 = vadd.f32 0.0, %v283
  %v285 = vpop.f32.mrb[0].mxu0
  %v286 = vadd.f32 0.0, %v285
  %v287 = vpop.f32.mrb[0].mxu0
  %v288 = vadd.f32 0.0, %v287
  %v289 = vpop.f32.mrb[0].mxu0
  %v290 = vadd.f32 0.0, %v289
  %291 = vmatprep.mubr.bf16.mxu0 0
  %292 = vmatmul.mubr.bf16.gmra.mrb[0].mxu0 %v154
  %v293 = vpop.f32.mrb[0].mxu0
  %v294 = vadd.f32 0.0, %v293
  %v295 = vpop.f32.mrb[0].mxu0
  %v296 = vadd.f32 0.0, %v295
  %v297 = vpop.f32.mrb[0].mxu0
  %v298 = vadd.f32 0.0, %v297
  %v299 = vpop.f32.mrb[0].mxu0
  %v300 = vadd.f32 0.0, %v299
  %301 = vmatprep.mubr.bf16.mxu0 0
  %302 = vmatmul.mubr.bf16.gmra.mrb[0].mxu0 %v155
  %v303 = vpop.f32.mrb[0].mxu0
  %v304 = vadd.f32 0.0, %v303
  %v305 = vpop.f32.mrb[0].mxu0
  %v306 = vadd.f32 0.0, %v305
  %v307 = vpop.f32.mrb[0].mxu0
  %v308 = vadd.f32 0.0, %v307
  %v309 = vpop.f32.mrb[0].mxu0
  %v310 = vadd.f32 0.0, %v309
  %311 = vmatprep.mubr.bf16.mxu0 0
  %312 = vmatmul.mubr.bf16.gmra.mrb[0].mxu0 %v156
  %v313 = vpop.f32.mrb[0].mxu0
  %v314 = vadd.f32 0.0, %v313
  %v315 = vpop.f32.mrb[0].mxu0
  %v316 = vadd.f32 0.0, %v315
  %v317 = vpop.f32.mrb[0].mxu0
  %v318 = vadd.f32 0.0, %v317
  %v319 = vpop.f32.mrb[0].mxu0
  %v320 = vadd.f32 0.0, %v319
  %321 = vmatprep.mubr.bf16.mxu0 0
  %322 = vmatmul.mubr.bf16.gmra.mrb[0].mxu0 %v157
  %v323 = vpop.f32.mrb[0].mxu0
  %v324 = vadd.f32 0.0, %v323
  %v325 = vpop.f32.mrb[0].mxu0
  %v326 = vadd.f32 0.0, %v325
  %v327 = vpop.f32.mrb[0].mxu0
  %v328 = vadd.f32 0.0, %v327
  %v329 = vpop.f32.mrb[0].mxu0
  %v330 = vadd.f32 0.0, %v329
  %331 = vmatprep.mubr.bf16.mxu0 0
  %332 = vmatmul.mubr.bf16.gmra.mrb[0].mxu0 %v158
  %v333 = vpop.f32.mrb[0].mxu0
  %v334 = vadd.f32 0.0, %v333
  %v335 = vpop.f32.mrb[0].mxu0
  %v336 = vadd.f32 0.0, %v335
  %v337 = vpop.f32.mrb[0].mxu0
  %v338 = vadd.f32 0.0, %v337
  %v339 = vpop.f32.mrb[0].mxu0
  %v340 = vadd.f32 0.0, %v339
  %341 = vmatprep.mubr.bf16.mxu0 0
  %342 = vmatmul.mubr.bf16.gmra.mrb[0].mxu0 %v159
  %v343 = vpop.f32.mrb[0].mxu0
  %v344 = vadd.f32 0.0, %v343
  %v345 = vpop.f32.mrb[0].mxu0
  %v346 = vadd.f32 0.0, %v345
  %v347 = vpop.f32.mrb[0].mxu0
  %v348 = vadd.f32 0.0, %v347
  %v349 = vpop.f32.mrb[0].mxu0
  %v350 = vadd.f32 0.0, %v349
  %351 = vmatprep.mubr.bf16.mxu0 0
  %352 = vmatmul.mubr.bf16.gmra.mrb[0].mxu0 %v160
  %v353 = vpop.f32.mrb[0].mxu0
  %v354 = vadd.f32 0.0, %v353
  %v355 = vpop.f32.mrb[0].mxu0
  %v356 = vadd.f32 0.0, %v355
  %v357 = vpop.f32.mrb[0].mxu0
  %v358 = vadd.f32 0.0, %v357
  %v359 = vpop.f32.mrb[0].mxu0
  %v360 = vadd.f32 0.0, %v359
  %361 = vdwg.mxu0
  %v362 = vadd.f32 %v73, %v284
  %v363 = vadd.f32 %v74, %v286
  %v364 = vadd.f32 %v75, %v288
  %v365 = vadd.f32 %v76, %v290
  %v366 = vadd.f32 %v77, %v294
  %v367 = vadd.f32 %v78, %v296
  %v368 = vadd.f32 %v79, %v298
  %v369 = vadd.f32 %v80, %v300
  %v370 = vadd.f32 %v81, %v304
  %v371 = vadd.f32 %v82, %v306
  %v372 = vadd.f32 %v83, %v308
  %v373 = vadd.f32 %v84, %v310
  %v374 = vadd.f32 %v85, %v314
  %v375 = vadd.f32 %v86, %v316
  %v376 = vadd.f32 %v87, %v318
  %v377 = vadd.f32 %v88, %v320
  %v378 = vadd.f32 %v89, %v324
  %v379 = vadd.f32 %v90, %v326
  %v380 = vadd.f32 %v91, %v328
  %v381 = vadd.f32 %v92, %v330
  %v382 = vadd.f32 %v93, %v334
  %v383 = vadd.f32 %v94, %v336
  %v384 = vadd.f32 %v95, %v338
  %v385 = vadd.f32 %v96, %v340
  %v386 = vadd.f32 %v97, %v344
  %v387 = vadd.f32 %v98, %v346
  %v388 = vadd.f32 %v99, %v348
  %v389 = vadd.f32 %v100, %v350
  %v390 = vadd.f32 %v101, %v354
  %v391 = vadd.f32 %v102, %v356
  %v392 = vadd.f32 %v103, %v358
  %v393 = vadd.f32 %v104, %v360
  %394 = vst [vmem:[#allocation2] sm:$0xff] %v362
  %395 = vst [vmem:[#allocation2 + $0x8] sm:$0xff] %v363
  %396 = vst [vmem:[#allocation2 + $0x10] sm:$0xff] %v364
  %397 = vst [vmem:[#allocation2 + $0x18] sm:$0xff] %v365
  %398 = vst [vmem:[#allocation2 + $0x20] sm:$0xff] %v366
  %399 = vst [vmem:[#allocation2 + $0x28] sm:$0xff] %v367
  %400 = vst [vmem:[#allocation2 + $0x30] sm:$0xff] %v368
  %401 = vst [vmem:[#allocation2 + $0x38] sm:$0xff] %v369
  %402 = vst [vmem:[#allocation2 + $0x40] sm:$0xff] %v370
  %403 = vst [vmem:[#allocation2 + $0x48] sm:$0xff] %v371
  %404 = vst [vmem:[#allocation2 + $0x50] sm:$0xff] %v372
  %405 = vst [vmem:[#allocation2 + $0x58] sm:$0xff] %v373
  %406 = vst [vmem:[#allocation2 + $0x60] sm:$0xff] %v374
  %407 = vst [vmem:[#allocation2 + $0x68] sm:$0xff] %v375
  %408 = vst [vmem:[#allocation2 + $0x70] sm:$0xff] %v376
  %409 = vst [vmem:[#allocation2 + $0x78] sm:$0xff] %v377
  %410 = vst [vmem:[#allocation2 + $0x80] sm:$0xff] %v378
  %411 = vst [vmem:[#allocation2 + $0x88] sm:$0xff] %v379
  %412 = vst [vmem:[#allocation2 + $0x90] sm:$0xff] %v380
  %413 = vst [vmem:[#allocation2 + $0x98] sm:$0xff] %v381
  %414 = vst [vmem:[#allocation2 + $0xa0] sm:$0xff] %v382
  %415 = vst [vmem:[#allocation2 + $0xa8] sm:$0xff] %v383
  %416 = vst [vmem:[#allocation2 + $0xb0] sm:$0xff] %v384
  %417 = vst [vmem:[#allocation2 + $0xb8] sm:$0xff] %v385
  %418 = vst [vmem:[#allocation2 + $0xc0] sm:$0xff] %v386
  %419 = vst [vmem:[#allocation2 + $0xc8] sm:$0xff] %v387
  %420 = vst [vmem:[#allocation2 + $0xd0] sm:$0xff] %v388
  %421 = vst [vmem:[#allocation2 + $0xd8] sm:$0xff] %v389
  %422 = vst [vmem:[#allocation2 + $0xe0] sm:$0xff] %v390
  %423 = vst [vmem:[#allocation2 + $0xe8] sm:$0xff] %v391
  %424 = vst [vmem:[#allocation2 + $0xf0] sm:$0xff] %v392
  %425 = vst [vmem:[#allocation2 + $0xf8] sm:$0xff] %v393
  // Predicated region
  $region18: #{dgi_forward.3} parent=0 // pred_check
    %p426 = pneg %p15
  $region19: #{dgi_forward.3} parent=0 // pred_check_branch
    %428 = sbr.rel (%p426) target = $region21
  $region20: #{dgi_forward.3} parent=0 // pred_region
    %v429 = vld [vmem:[#allocation2] sm:$0xff]
    %v430 = vld [vmem:[#allocation2 + $0x8] sm:$0xff]
    %v431 = vld [vmem:[#allocation2 + $0x10] sm:$0xff]
    %v432 = vld [vmem:[#allocation2 + $0x18] sm:$0xff]
    %v433 = vld [vmem:[#allocation2 + $0x20] sm:$0xff]
    %v434 = vld [vmem:[#allocation2 + $0x28] sm:$0xff]
    %v435 = vld [vmem:[#allocation2 + $0x30] sm:$0xff]
    %v436 = vld [vmem:[#allocation2 + $0x38] sm:$0xff]
    %v437 = vld [vmem:[#allocation2 + $0x40] sm:$0xff]
    %v438 = vld [vmem:[#allocation2 + $0x48] sm:$0xff]
    %v439 = vld [vmem:[#allocation2 + $0x50] sm:$0xff]
    %v440 = vld [vmem:[#allocation2 + $0x58] sm:$0xff]
    %v441 = vld [vmem:[#allocation2 + $0x60] sm:$0xff]
    %v442 = vld [vmem:[#allocation2 + $0x68] sm:$0xff]
    %v443 = vld [vmem:[#allocation2 + $0x70] sm:$0xff]
    %v444 = vld [vmem:[#allocation2 + $0x78] sm:$0xff]
    %v445 = vld [vmem:[#allocation2 + $0x80] sm:$0xff]
    %v446 = vld [vmem:[#allocation2 + $0x88] sm:$0xff]
    %v447 = vld [vmem:[#allocation2 + $0x90] sm:$0xff]
    %v448 = vld [vmem:[#allocation2 + $0x98] sm:$0xff]
    %v449 = vld [vmem:[#allocation2 + $0xa0] sm:$0xff]
    %v450 = vld [vmem:[#allocation2 + $0xa8] sm:$0xff]
    %v451 = vld [vmem:[#allocation2 + $0xb0] sm:$0xff]
    %v452 = vld [vmem:[#allocation2 + $0xb8] sm:$0xff]
    %v453 = vld [vmem:[#allocation2 + $0xc0] sm:$0xff]
    %v454 = vld [vmem:[#allocation2 + $0xc8] sm:$0xff]
    %v455 = vld [vmem:[#allocation2 + $0xd0] sm:$0xff]
    %v456 = vld [vmem:[#allocation2 + $0xd8] sm:$0xff]
    %v457 = vld [vmem:[#allocation2 + $0xe0] sm:$0xff]
    %v458 = vld [vmem:[#allocation2 + $0xe8] sm:$0xff]
    %v459 = vld [vmem:[#allocation2 + $0xf0] sm:$0xff]
    %v460 = vld [vmem:[#allocation2 + $0xf8] sm:$0xff]
    %v461 = vld [vmem:[%s2] sm:$0x3]
    %v463 = vlaneseq
    %v464 = vshrl.u32 %v463, 7
    %v465 = vsub.s32 0, %v464
    %v466 = vrot.slane %v461, %v465
    %v467 = vlaneseq
    %v468 = vshrl.u32 %v467, 7
    %v469 = vsub.s32 1, %v468
    %v470 = vrot.slane %v461, %v469
    %v473 = vadd.f32 %v429, %v466
    %v474 = vadd.f32 %v430, %v470
    %v475 = vadd.f32 %v431, %v466
    %v476 = vadd.f32 %v432, %v470
    %v477 = vadd.f32 %v433, %v466
    %v478 = vadd.f32 %v434, %v470
    %v479 = vadd.f32 %v435, %v466
    %v480 = vadd.f32 %v436, %v470
    %v481 = vadd.f32 %v437, %v466
    %v482 = vadd.f32 %v438, %v470
    %v483 = vadd.f32 %v439, %v466
    %v484 = vadd.f32 %v440, %v470
    %v485 = vadd.f32 %v441, %v466
    %v486 = vadd.f32 %v442, %v470
    %v487 = vadd.f32 %v443, %v466
    %v488 = vadd.f32 %v444, %v470
    %v489 = vadd.f32 %v445, %v466
    %v490 = vadd.f32 %v446, %v470
    %v491 = vadd.f32 %v447, %v466
    %v492 = vadd.f32 %v448, %v470
    %v493 = vadd.f32 %v449, %v466
    %v494 = vadd.f32 %v450, %v470
    %v495 = vadd.f32 %v451, %v466
    %v496 = vadd.f32 %v452, %v470
    %v497 = vadd.f32 %v453, %v466
    %v498 = vadd.f32 %v454, %v470
    %v499 = vadd.f32 %v455, %v466
    %v500 = vadd.f32 %v456, %v470
    %v501 = vadd.f32 %v457, %v466
    %v502 = vadd.f32 %v458, %v470
    %v503 = vadd.f32 %v459, %v466
    %v504 = vadd.f32 %v460, %v470
    %v505 = vmax.f32 %v473, 0.0
    %v506 = vmax.f32 %v474, 0.0
    %v507 = vmax.f32 %v475, 0.0
    %v508 = vmax.f32 %v476, 0.0
    %v509 = vmax.f32 %v477, 0.0
    %v510 = vmax.f32 %v478, 0.0
    %v511 = vmax.f32 %v479, 0.0
    %v512 = vmax.f32 %v480, 0.0
    %v513 = vmax.f32 %v481, 0.0
    %v514 = vmax.f32 %v482, 0.0
    %v515 = vmax.f32 %v483, 0.0
    %v516 = vmax.f32 %v484, 0.0
    %v517 = vmax.f32 %v485, 0.0
    %v518 = vmax.f32 %v486, 0.0
    %v519 = vmax.f32 %v487, 0.0
    %v520 = vmax.f32 %v488, 0.0
    %v521 = vmax.f32 %v489, 0.0
    %v522 = vmax.f32 %v490, 0.0
    %v523 = vmax.f32 %v491, 0.0
    %v524 = vmax.f32 %v492, 0.0
    %v525 = vmax.f32 %v493, 0.0
    %v526 = vmax.f32 %v494, 0.0
    %v527 = vmax.f32 %v495, 0.0
    %v528 = vmax.f32 %v496, 0.0
    %v529 = vmax.f32 %v497, 0.0
    %v530 = vmax.f32 %v498, 0.0
    %v531 = vmax.f32 %v499, 0.0
    %v532 = vmax.f32 %v500, 0.0
    %v533 = vmax.f32 %v501, 0.0
    %v534 = vmax.f32 %v502, 0.0
    %v535 = vmax.f32 %v503, 0.0
    %v536 = vmax.f32 %v504, 0.0
    %v537 = vpack.c.bf16 %v507, %v505
    %v538 = vpack.c.bf16 %v508, %v506
    %v539 = vpack.c.bf16 %v511, %v509
    %v540 = vpack.c.bf16 %v512, %v510
    %v541 = vpack.c.bf16 %v515, %v513
    %v542 = vpack.c.bf16 %v516, %v514
    %v543 = vpack.c.bf16 %v519, %v517
    %v544 = vpack.c.bf16 %v520, %v518
    %v545 = vpack.c.bf16 %v523, %v521
    %v546 = vpack.c.bf16 %v524, %v522
    %v547 = vpack.c.bf16 %v527, %v525
    %v548 = vpack.c.bf16 %v528, %v526
    %v549 = vpack.c.bf16 %v531, %v529
    %v550 = vpack.c.bf16 %v532, %v530
    %v551 = vpack.c.bf16 %v535, %v533
    %v552 = vpack.c.bf16 %v536, %v534
    %v569 = vunpack.c.l.b16 %v537
    %v570 = vunpack.c.l.b16 %v538
    %v571 = vunpack.c.h.b16 %v537
    %v572 = vunpack.c.h.b16 %v538
    %v573 = vunpack.c.l.b16 %v539
    %v574 = vunpack.c.l.b16 %v540
    %v575 = vunpack.c.h.b16 %v539
    %v576 = vunpack.c.h.b16 %v540
    %v577 = vunpack.c.l.b16 %v541
    %v578 = vunpack.c.l.b16 %v542
    %v579 = vunpack.c.h.b16 %v541
    %v580 = vunpack.c.h.b16 %v542
    %v581 = vunpack.c.l.b16 %v543
    %v582 = vunpack.c.l.b16 %v544
    %v583 = vunpack.c.h.b16 %v543
    %v584 = vunpack.c.h.b16 %v544
    %v585 = vunpack.c.l.b16 %v545
    %v586 = vunpack.c.l.b16 %v546
    %v587 = vunpack.c.h.b16 %v545
    %v588 = vunpack.c.h.b16 %v546
    %v589 = vunpack.c.l.b16 %v547
    %v590 = vunpack.c.l.b16 %v548
    %v591 = vunpack.c.h.b16 %v547
    %v592 = vunpack.c.h.b16 %v548
    %v593 = vunpack.c.l.b16 %v549
    %v594 = vunpack.c.l.b16 %v550
    %v595 = vunpack.c.h.b16 %v549
    %v596 = vunpack.c.h.b16 %v550
    %v597 = vunpack.c.l.b16 %v551
    %v598 = vunpack.c.l.b16 %v552
    %v599 = vunpack.c.h.b16 %v551
    %v600 = vunpack.c.h.b16 %v552
    %v601 = vpack.c.b16 %v570, %v569
    %v602 = vpack.c.b16 %v572, %v571
    %v603 = vpack.c.b16 %v574, %v573
    %v604 = vpack.c.b16 %v576, %v575
    %v605 = vpack.c.b16 %v578, %v577
    %v606 = vpack.c.b16 %v580, %v579
    %v607 = vpack.c.b16 %v582, %v581
    %v608 = vpack.c.b16 %v584, %v583
    %v609 = vpack.c.b16 %v586, %v585
    %v610 = vpack.c.b16 %v588, %v587
    %v611 = vpack.c.b16 %v590, %v589
    %v612 = vpack.c.b16 %v592, %v591
    %v613 = vpack.c.b16 %v594, %v593
    %v614 = vpack.c.b16 %v596, %v595
    %v615 = vpack.c.b16 %v598, %v597
    %v616 = vpack.c.b16 %v600, %v599
    %633 = vst [vmem:[%s3] sm:$0xff] %v601
    %634 = vst [vmem:[%s3 + $0x8] sm:$0xff] %v602
    %635 = vst [vmem:[%s3 + $0x10] sm:$0xff] %v603
    %636 = vst [vmem:[%s3 + $0x18] sm:$0xff] %v604
    %637 = vst [vmem:[%s3 + $0x20] sm:$0xff] %v605
    %638 = vst [vmem:[%s3 + $0x28] sm:$0xff] %v606
    %639 = vst [vmem:[%s3 + $0x30] sm:$0xff] %v607
    %640 = vst [vmem:[%s3 + $0x38] sm:$0xff] %v608
    %641 = vst [vmem:[%s3 + $0x40] sm:$0xff] %v609
    %642 = vst [vmem:[%s3 + $0x48] sm:$0xff] %v610
    %643 = vst [vmem:[%s3 + $0x50] sm:$0xff] %v611
    %644 = vst [vmem:[%s3 + $0x58] sm:$0xff] %v612
    %645 = vst [vmem:[%s3 + $0x60] sm:$0xff] %v613
    %646 = vst [vmem:[%s3 + $0x68] sm:$0xff] %v614
    %647 = vst [vmem:[%s3 + $0x70] sm:$0xff] %v615
    %648 = vst [vmem:[%s3 + $0x78] sm:$0xff] %v616
  $region21: #{dgi_forward.3} parent=0 // pred_fallthru
    _
  // Predicated region
  $region22: #{dgi_forward.3} parent=0 // pred_check
    _
  $region23: #{dgi_forward.3} parent=0 // pred_check_branch
    %650 = sbr.rel (0) target = $region25
  $region24: #{dgi_forward.3} parent=0 // pred_region
    _
  $region25: #{dgi_forward.3} parent=0 // pred_fallthru
    _
  // Predicated region
  $region26: #{dgi_forward.3} parent=0 // pred_check
    _
  $region27: #{dgi_forward.3} parent=0 // pred_check_branch
    %652 = sbr.rel (0) target = $region29
  $region28: #{dgi_forward.3} parent=0 // pred_region
    _
  $region29: #{dgi_forward.3} parent=0 // pred_fallthru
    _

// kernel: dgi_forward.5
$region0: #{dgi_forward.5}
  #allocation0 [shape = 'u32[]', space=smem, size = 0x4, offset = 0x4, fixed_abs, tag = 'smem constant byte address 0x4 - core index']
  #allocation1 [shape = 'u32[144,128]{1,0:T(1,128)}', space=vmem, size = 0x12000, scoped, tag = 'internal scratch']
  %s0 = inlined_call_operand.vmem [shape: s32[128,1], index: 0, kind: input, shape index: {}]
  %s1 = inlined_call_operand.vmem [shape: f32[8,128], index: 1, kind: input, shape index: {}]
  %s2 = inlined_call_operand.vmem [shape: bf16[128,256], index: 2, kind: input, shape index: {}]
  %s3 = inlined_call_operand.vmem [shape: f32[2,128], index: 3, kind: output, shape index: {}]
  %s4 = sld [smem:[#allocation0]]
  $region22: #{dgi_forward.5} parent=0
    _
  %s6 = ssub.s32 1, %s4
  %s7 = scalar_select 0, %s6, %s4
  // Predicated region
  $region2: #{dgi_forward.5} parent=0 // pred_check
    _
  $region3: #{dgi_forward.5} parent=0 // pred_check_branch
    %9 = sbr.rel (0) target = $region5
  $region4: #{dgi_forward.5} parent=0 // pred_region
    _
  $region5: #{dgi_forward.5} parent=0 // pred_fallthru
    _
  // Predicated region
  $region6: #{dgi_forward.5} parent=0 // pred_check
    _
  $region7: #{dgi_forward.5} parent=0 // pred_check_branch
    %11 = sbr.rel (0) target = $region9
  $region8: #{dgi_forward.5} parent=0 // pred_region
    _
  $region9: #{dgi_forward.5} parent=0 // pred_fallthru
    _
  // Predicated region
  $region10: #{dgi_forward.5} parent=0 // pred_check
    _
  $region11: #{dgi_forward.5} parent=0 // pred_check_branch
    %13 = sbr.rel (0) target = $region13
  $region12: #{dgi_forward.5} parent=0 // pred_region
    _
  $region13: #{dgi_forward.5} parent=0 // pred_fallthru
    _
  %v14 = vld [vmem:[%s0] sm:$0xff]
  %v15 = vld [vmem:[%s0 + $0x8] sm:$0xff]
  %v16 = vld [vmem:[%s0 + $0x10] sm:$0xff]
  %v17 = vld [vmem:[%s0 + $0x18] sm:$0xff]
  %v18 = vld [vmem:[%s0 + $0x20] sm:$0xff]
  %v19 = vld [vmem:[%s0 + $0x28] sm:$0xff]
  %v20 = vld [vmem:[%s0 + $0x30] sm:$0xff]
  %v21 = vld [vmem:[%s0 + $0x38] sm:$0xff]
  %v22 = vld [vmem:[%s0 + $0x40] sm:$0xff]
  %v23 = vld [vmem:[%s0 + $0x48] sm:$0xff]
  %v24 = vld [vmem:[%s0 + $0x50] sm:$0xff]
  %v25 = vld [vmem:[%s0 + $0x58] sm:$0xff]
  %v26 = vld [vmem:[%s0 + $0x60] sm:$0xff]
  %v27 = vld [vmem:[%s0 + $0x68] sm:$0xff]
  %v28 = vld [vmem:[%s0 + $0x70] sm:$0xff]
  %v29 = vld [vmem:[%s0 + $0x78] sm:$0xff]
  %v30 = vlaneseq
  %v31 = vand.u32 %v30, 127
  %32 = vset.pattern.permute.xlu0 0
  %33 = vperm.xlu0 %32, %v14
  %v34 = vpop.permute.xlu0 %33
  %35 = vset.pattern.permute.xlu0 0
  %36 = vperm.xlu0 %35, %v15
  %v37 = vpop.permute.xlu0 %36
  %38 = vset.pattern.permute.xlu0 0
  %39 = vperm.xlu0 %38, %v16
  %v40 = vpop.permute.xlu0 %39
  %41 = vset.pattern.permute.xlu0 0
  %42 = vperm.xlu0 %41, %v17
  %v43 = vpop.permute.xlu0 %42
  %44 = vset.pattern.permute.xlu0 0
  %45 = vperm.xlu0 %44, %v18
  %v46 = vpop.permute.xlu0 %45
  %47 = vset.pattern.permute.xlu0 0
  %48 = vperm.xlu0 %47, %v19
  %v49 = vpop.permute.xlu0 %48
  %50 = vset.pattern.permute.xlu0 0
  %51 = vperm.xlu0 %50, %v20
  %v52 = vpop.permute.xlu0 %51
  %53 = vset.pattern.permute.xlu0 0
  %54 = vperm.xlu0 %53, %v21
  %v55 = vpop.permute.xlu0 %54
  %56 = vset.pattern.permute.xlu0 0
  %57 = vperm.xlu0 %56, %v22
  %v58 = vpop.permute.xlu0 %57
  %59 = vset.pattern.permute.xlu0 0
  %60 = vperm.xlu0 %59, %v23
  %v61 = vpop.permute.xlu0 %60
  %62 = vset.pattern.permute.xlu0 0
  %63 = vperm.xlu0 %62, %v24
  %v64 = vpop.permute.xlu0 %63
  %65 = vset.pattern.permute.xlu0 0
  %66 = vperm.xlu0 %65, %v25
  %v67 = vpop.permute.xlu0 %66
  %68 = vset.pattern.permute.xlu0 0
  %69 = vperm.xlu0 %68, %v26
  %v70 = vpop.permute.xlu0 %69
  %71 = vset.pattern.permute.xlu0 0
  %72 = vperm.xlu0 %71, %v27
  %v73 = vpop.permute.xlu0 %72
  %74 = vset.pattern.permute.xlu0 0
  %75 = vperm.xlu0 %74, %v28
  %v76 = vpop.permute.xlu0 %75
  %77 = vset.pattern.permute.xlu0 0
  %78 = vperm.xlu0 %77, %v29
  %v79 = vpop.permute.xlu0 %78
  %vm80 = vcmp.eq.s32.totalorder %v34, %v31
  %vm81 = vcmp.eq.s32.totalorder %v37, %v31
  %vm82 = vcmp.eq.s32.totalorder %v40, %v31
  %vm83 = vcmp.eq.s32.totalorder %v43, %v31
  %vm84 = vcmp.eq.s32.totalorder %v46, %v31
  %vm85 = vcmp.eq.s32.totalorder %v49, %v31
  %vm86 = vcmp.eq.s32.totalorder %v52, %v31
  %vm87 = vcmp.eq.s32.totalorder %v55, %v31
  %vm88 = vcmp.eq.s32.totalorder %v58, %v31
  %vm89 = vcmp.eq.s32.totalorder %v61, %v31
  %vm90 = vcmp.eq.s32.totalorder %v64, %v31
  %vm91 = vcmp.eq.s32.totalorder %v67, %v31
  %vm92 = vcmp.eq.s32.totalorder %v70, %v31
  %vm93 = vcmp.eq.s32.totalorder %v73, %v31
  %vm94 = vcmp.eq.s32.totalorder %v76, %v31
  %vm95 = vcmp.eq.s32.totalorder %v79, %v31
  %v96 = vsel %vm80, 1, 0
  %v97 = vsel %vm81, 1, 0
  %v98 = vsel %vm82, 1, 0
  %v99 = vsel %vm83, 1, 0
  %v100 = vsel %vm84, 1, 0
  %v101 = vsel %vm85, 1, 0
  %v102 = vsel %vm86, 1, 0
  %v103 = vsel %vm87, 1, 0
  %v104 = vsel %vm88, 1, 0
  %v105 = vsel %vm89, 1, 0
  %v106 = vsel %vm90, 1, 0
  %v107 = vsel %vm91, 1, 0
  %v108 = vsel %vm92, 1, 0
  %v109 = vsel %vm93, 1, 0
  %v110 = vsel %vm94, 1, 0
  %v111 = vsel %vm95, 1, 0
  %v112 = vcvt.s32.f32 %v96
  %v113 = vcvt.s32.f32 %v97
  %v114 = vcvt.s32.f32 %v98
  %v115 = vcvt.s32.f32 %v99
  %v116 = vcvt.s32.f32 %v100
  %v117 = vcvt.s32.f32 %v101
  %v118 = vcvt.s32.f32 %v102
  %v119 = vcvt.s32.f32 %v103
  %v120 = vcvt.s32.f32 %v104
  %v121 = vcvt.s32.f32 %v105
  %v122 = vcvt.s32.f32 %v106
  %v123 = vcvt.s32.f32 %v107
  %v124 = vcvt.s32.f32 %v108
  %v125 = vcvt.s32.f32 %v109
  %v126 = vcvt.s32.f32 %v110
  %v127 = vcvt.s32.f32 %v111
  %v128 = vld [vmem:[%s1] sm:$0xff]
  %vm129 = vcmask 64512
  %v131 = vsel %vm129, %v112, 0
  %v134 = vsel %vm129, %v113, 0
  %v137 = vsel %vm129, %v114, 0
  %v140 = vsel %vm129, %v115, 0
  %v143 = vsel %vm129, %v116, 0
  %v146 = vsel %vm129, %v117, 0
  %v149 = vsel %vm129, %v118, 0
  %v152 = vsel %vm129, %v119, 0
  %v155 = vsel %vm129, %v120, 0
  %v158 = vsel %vm129, %v121, 0
  %v161 = vsel %vm129, %v122, 0
  %v164 = vsel %vm129, %v123, 0
  %v167 = vsel %vm129, %v124, 0
  %v170 = vsel %vm129, %v125, 0
  %v173 = vsel %vm129, %v126, 0
  %v176 = vsel %vm129, %v127, 0
  %178 = vmatprep.subr.mxu0 0.0
  %179 = vmatpush1.msra.mxu0 %v128
  %180 = vmatprep.subr.mxu0 0.0
  %181 = vmatpush1.msra.mxu0 0.0
  %182 = vmatprep.subr.mxu0 0.0
  %183 = vmatpush1.msra.mxu0 0.0
  %184 = vmatprep.subr.mxu0 0.0
  %185 = vmatpush1.msra.mxu0 0.0
  %186 = vmatprep.subr.mxu0 0.0
  %187 = vmatpush1.msra.mxu0 0.0
  %188 = vmatprep.subr.mxu0 0.0
  %189 = vmatpush1.msra.mxu0 0.0
  %190 = vmatprep.subr.mxu0 0.0
  %191 = vmatpush1.msra.mxu0 0.0
  %192 = vmatprep.subr.mxu0 0.0
  %193 = vmatpush1.msra.mxu0 0.0
  %194 = vmatprep.subr.mxu0 0.0
  %195 = vmatpush1.msra.mxu0 0.0
  %196 = vmatprep.subr.mxu0 0.0
  %197 = vmatpush1.msra.mxu0 0.0
  %198 = vmatprep.subr.mxu0 0.0
  %199 = vmatpush1.msra.mxu0 0.0
  %200 = vmatprep.subr.mxu0 0.0
  %201 = vmatpush1.msra.mxu0 0.0
  %202 = vmatprep.subr.mxu0 0.0
  %203 = vmatpush1.msra.mxu0 0.0
  %204 = vmatprep.subr.mxu0 0.0
  %205 = vmatpush1.msra.mxu0 0.0
  %206 = vmatprep.subr.mxu0 0.0
  %207 = vmatpush1.msra.mxu0 0.0
  %208 = vmatprep.subr.mxu0 0.0
  %209 = vmatpush1.msra.mxu0 0.0
  %210 = vmatprep.subr.mxu0 0.0
  %211 = vmatpush1.msra.mxu0 0.0
  %212 = vmatprep.subr.mxu0 0.0
  %213 = vmatpush1.msra.mxu0 0.0
  %214 = vmatprep.subr.mxu0 0.0
  %215 = vmatpush1.msra.mxu0 0.0
  %216 = vmatprep.subr.mxu0 0.0
  %217 = vmatpush1.msra.mxu0 0.0
  %218 = vmatprep.subr.mxu0 0.0
  %219 = vmatpush1.msra.mxu0 0.0
  %220 = vmatprep.subr.mxu0 0.0
  %221 = vmatpush1.msra.mxu0 0.0
  %222 = vmatprep.subr.mxu0 0.0
  %223 = vmatpush1.msra.mxu0 0.0
  %224 = vmatprep.subr.mxu0 0.0
  %225 = vmatpush1.msra.mxu0 0.0
  %226 = vmatprep.subr.mxu0 0.0
  %227 = vmatpush1.msra.mxu0 0.0
  %228 = vmatprep.subr.mxu0 0.0
  %229 = vmatpush1.msra.mxu0 0.0
  %230 = vmatprep.subr.mxu0 0.0
  %231 = vmatpush1.msra.mxu0 0.0
  %232 = vmatprep.subr.mxu0 0.0
  %233 = vmatpush1.msra.mxu0 0.0
  %234 = vmatprep.subr.mxu0 0.0
  %235 = vmatpush1.msra.mxu0 0.0
  %236 = vmatprep.subr.mxu0 0.0
  %237 = vmatpush1.msra.mxu0 0.0
  %238 = vmatprep.subr.mxu0 0.0
  %239 = vmatpush1.msra.mxu0 0.0
  %240 = vmatprep.subr.mxu0 0.0
  %241 = vmatpush1.msra.mxu0 0.0
  %242 = vmatprep.mubr.f32.mxu0 0.0
  %243 = vmatmul.mubr.f32.gmra.mrb[0].mxu0 %v131
  %v244 = vpop.f32.mrb[0].mxu0
  %v245 = vadd.f32 0.0, %v244
  %v246 = vpop.f32.mrb[0].mxu0
  %247 = vmatprep.mubr.f32.mxu0 0.0
  %248 = vmatmul.mubr.f32.gmra.mrb[0].mxu0 %v134
  %v249 = vpop.f32.mrb[0].mxu0
  %v250 = vadd.f32 0.0, %v249
  %v251 = vpop.f32.mrb[0].mxu0
  %252 = vmatprep.mubr.f32.mxu0 0.0
  %253 = vmatmul.mubr.f32.gmra.mrb[0].mxu0 %v137
  %v254 = vpop.f32.mrb[0].mxu0
  %v255 = vadd.f32 0.0, %v254
  %v256 = vpop.f32.mrb[0].mxu0
  %257 = vmatprep.mubr.f32.mxu0 0.0
  %258 = vmatmul.mubr.f32.gmra.mrb[0].mxu0 %v140
  %v259 = vpop.f32.mrb[0].mxu0
  %v260 = vadd.f32 0.0, %v259
  %v261 = vpop.f32.mrb[0].mxu0
  %262 = vmatprep.mubr.f32.mxu0 0.0
  %263 = vmatmul.mubr.f32.gmra.mrb[0].mxu0 %v143
  %v264 = vpop.f32.mrb[0].mxu0
  %v265 = vadd.f32 0.0, %v264
  %v266 = vpop.f32.mrb[0].mxu0
  %267 = vmatprep.mubr.f32.mxu0 0.0
  %268 = vmatmul.mubr.f32.gmra.mrb[0].mxu0 %v146
  %v269 = vpop.f32.mrb[0].mxu0
  %v270 = vadd.f32 0.0, %v269
  %v271 = vpop.f32.mrb[0].mxu0
  %272 = vmatprep.mubr.f32.mxu0 0.0
  %273 = vmatmul.mubr.f32.gmra.mrb[0].mxu0 %v149
  %v274 = vpop.f32.mrb[0].mxu0
  %v275 = vadd.f32 0.0, %v274
  %v276 = vpop.f32.mrb[0].mxu0
  %277 = vmatprep.mubr.f32.mxu0 0.0
  %278 = vmatmul.mubr.f32.gmra.mrb[0].mxu0 %v152
  %v279 = vpop.f32.mrb[0].mxu0
  %v280 = vadd.f32 0.0, %v279
  %v281 = vpop.f32.mrb[0].mxu0
  %282 = vmatprep.mubr.f32.mxu0 0.0
  %283 = vmatmul.mubr.f32.gmra.mrb[0].mxu0 %v155
  %v284 = vpop.f32.mrb[0].mxu0
  %v285 = vadd.f32 0.0, %v284
  %v286 = vpop.f32.mrb[0].mxu0
  %287 = vmatprep.mubr.f32.mxu0 0.0
  %288 = vmatmul.mubr.f32.gmra.mrb[0].mxu0 %v158
  %v289 = vpop.f32.mrb[0].mxu0
  %v290 = vadd.f32 0.0, %v289
  %v291 = vpop.f32.mrb[0].mxu0
  %292 = vmatprep.mubr.f32.mxu0 0.0
  %293 = vmatmul.mubr.f32.gmra.mrb[0].mxu0 %v161
  %v294 = vpop.f32.mrb[0].mxu0
  %v295 = vadd.f32 0.0, %v294
  %v296 = vpop.f32.mrb[0].mxu0
  %297 = vmatprep.mubr.f32.mxu0 0.0
  %298 = vmatmul.mubr.f32.gmra.mrb[0].mxu0 %v164
  %v299 = vpop.f32.mrb[0].mxu0
  %v300 = vadd.f32 0.0, %v299
  %v301 = vpop.f32.mrb[0].mxu0
  %302 = vmatprep.mubr.f32.mxu0 0.0
  %303 = vmatmul.mubr.f32.gmra.mrb[0].mxu0 %v167
  %v304 = vpop.f32.mrb[0].mxu0
  %v305 = vadd.f32 0.0, %v304
  %v306 = vpop.f32.mrb[0].mxu0
  %307 = vmatprep.mubr.f32.mxu0 0.0
  %308 = vmatmul.mubr.f32.gmra.mrb[0].mxu0 %v170
  %v309 = vpop.f32.mrb[0].mxu0
  %v310 = vadd.f32 0.0, %v309
  %v311 = vpop.f32.mrb[0].mxu0
  %312 = vmatprep.mubr.f32.mxu0 0.0
  %313 = vmatmul.mubr.f32.gmra.mrb[0].mxu0 %v173
  %v314 = vpop.f32.mrb[0].mxu0
  %v315 = vadd.f32 0.0, %v314
  %v316 = vpop.f32.mrb[0].mxu0
  %317 = vmatprep.mubr.f32.mxu0 0.0
  %318 = vmatmul.mubr.f32.gmra.mrb[0].mxu0 %v176
  %v319 = vpop.f32.mrb[0].mxu0
  %v320 = vadd.f32 0.0, %v319
  %v321 = vpop.f32.mrb[0].mxu0
  %322 = vdwg.mxu0
  %v323 = vld [vmem:[%s2] sm:$0xff]
  %v324 = vld [vmem:[%s2 + $0x8] sm:$0xff]
  %v325 = vld [vmem:[%s2 + $0x10] sm:$0xff]
  %v326 = vld [vmem:[%s2 + $0x18] sm:$0xff]
  %v327 = vld [vmem:[%s2 + $0x20] sm:$0xff]
  %v328 = vld [vmem:[%s2 + $0x28] sm:$0xff]
  %v329 = vld [vmem:[%s2 + $0x30] sm:$0xff]
  %v330 = vld [vmem:[%s2 + $0x38] sm:$0xff]
  %v331 = vld [vmem:[%s2 + $0x40] sm:$0xff]
  %v332 = vld [vmem:[%s2 + $0x48] sm:$0xff]
  %v333 = vld [vmem:[%s2 + $0x50] sm:$0xff]
  %v334 = vld [vmem:[%s2 + $0x58] sm:$0xff]
  %v335 = vld [vmem:[%s2 + $0x60] sm:$0xff]
  %v336 = vld [vmem:[%s2 + $0x68] sm:$0xff]
  %v337 = vld [vmem:[%s2 + $0x70] sm:$0xff]
  %v338 = vld [vmem:[%s2 + $0x78] sm:$0xff]
  %v339 = vunpack.c.l.bf16 %v323
  %v340 = vunpack.c.h.bf16 %v323
  %v341 = vunpack.c.l.bf16 %v324
  %v342 = vunpack.c.h.bf16 %v324
  %v343 = vunpack.c.l.bf16 %v325
  %v344 = vunpack.c.h.bf16 %v325
  %v345 = vunpack.c.l.bf16 %v326
  %v346 = vunpack.c.h.bf16 %v326
  %v347 = vunpack.c.l.bf16 %v327
  %v348 = vunpack.c.h.bf16 %v327
  %v349 = vunpack.c.l.bf16 %v328
  %v350 = vunpack.c.h.bf16 %v328
  %v351 = vunpack.c.l.bf16 %v329
  %v352 = vunpack.c.h.bf16 %v329
  %v353 = vunpack.c.l.bf16 %v330
  %v354 = vunpack.c.h.bf16 %v330
  %v355 = vunpack.c.l.bf16 %v331
  %v356 = vunpack.c.h.bf16 %v331
  %v357 = vunpack.c.l.bf16 %v332
  %v358 = vunpack.c.h.bf16 %v332
  %v359 = vunpack.c.l.bf16 %v333
  %v360 = vunpack.c.h.bf16 %v333
  %v361 = vunpack.c.l.bf16 %v334
  %v362 = vunpack.c.h.bf16 %v334
  %v363 = vunpack.c.l.bf16 %v335
  %v364 = vunpack.c.h.bf16 %v335
  %v365 = vunpack.c.l.bf16 %v336
  %v366 = vunpack.c.h.bf16 %v336
  %v367 = vunpack.c.l.bf16 %v337
  %v368 = vunpack.c.h.bf16 %v337
  %v369 = vunpack.c.l.bf16 %v338
  %v370 = vunpack.c.h.bf16 %v338
  %v371 = vmul.f32 %v339, %v245
  %v372 = vmul.f32 %v341, %v250
  %v373 = vmul.f32 %v343, %v255
  %v374 = vmul.f32 %v345, %v260
  %v375 = vmul.f32 %v347, %v265
  %v376 = vmul.f32 %v349, %v270
  %v377 = vmul.f32 %v351, %v275
  %v378 = vmul.f32 %v353, %v280
  %v379 = vmul.f32 %v355, %v285
  %v380 = vmul.f32 %v357, %v290
  %v381 = vmul.f32 %v359, %v295
  %v382 = vmul.f32 %v361, %v300
  %v383 = vmul.f32 %v363, %v305
  %v384 = vmul.f32 %v365, %v310
  %v385 = vmul.f32 %v367, %v315
  %v386 = vmul.f32 %v369, %v320
  %v387 = vmul.f32 %v340, %v245
  %v388 = vmul.f32 %v342, %v250
  %v389 = vmul.f32 %v344, %v255
  %v390 = vmul.f32 %v346, %v260
  %v391 = vmul.f32 %v348, %v265
  %v392 = vmul.f32 %v350, %v270
  %v393 = vmul.f32 %v352, %v275
  %v394 = vmul.f32 %v354, %v280
  %v395 = vmul.f32 %v356, %v285
  %v396 = vmul.f32 %v358, %v290
  %v397 = vmul.f32 %v360, %v295
  %v398 = vmul.f32 %v362, %v300
  %v399 = vmul.f32 %v364, %v305
  %v400 = vmul.f32 %v366, %v310
  %v401 = vmul.f32 %v368, %v315
  %v402 = vmul.f32 %v370, %v320
  %403 = vmatprep.subr.mxu0 0.0
  %404 = vmatpush1.xpose.msra.mxu0 %v371
  %405 = vmatprep.subr.mxu0 0.0
  %406 = vmatpush1.xpose.msra.mxu0 %v372
  %407 = vmatprep.subr.mxu0 0.0
  %408 = vmatpush1.xpose.msra.mxu0 %v373
  %409 = vmatprep.subr.mxu0 0.0
  %410 = vmatpush1.xpose.msra.mxu0 %v374
  %411 = vmatprep.subr.mxu0 0.0
  %412 = vmatpush1.xpose.msra.mxu0 %v375
  %413 = vmatprep.subr.mxu0 0.0
  %414 = vmatpush1.xpose.msra.mxu0 %v376
  %415 = vmatprep.subr.mxu0 0.0
  %416 = vmatpush1.xpose.msra.mxu0 %v377
  %417 = vmatprep.subr.mxu0 0.0
  %418 = vmatpush1.xpose.msra.mxu0 %v378
  %419 = vmatprep.subr.mxu0 0.0
  %420 = vmatpush1.xpose.msra.mxu0 %v379
  %421 = vmatprep.subr.mxu0 0.0
  %422 = vmatpush1.xpose.msra.mxu0 %v380
  %423 = vmatprep.subr.mxu0 0.0
  %424 = vmatpush1.xpose.msra.mxu0 %v381
  %425 = vmatprep.subr.mxu0 0.0
  %426 = vmatpush1.xpose.msra.mxu0 %v382
  %427 = vmatprep.subr.mxu0 0.0
  %428 = vmatpush1.xpose.msra.mxu0 %v383
  %429 = vmatprep.subr.mxu0 0.0
  %430 = vmatpush1.xpose.msra.mxu0 %v384
  %431 = vmatprep.subr.mxu0 0.0
  %432 = vmatpush1.xpose.msra.mxu0 %v385
  %433 = vmatprep.subr.mxu0 0.0
  %434 = vmatpush1.xpose.msra.mxu0 %v386
  %435 = vmatprep.subr.mxu0 0.0
  %436 = vmatpush1.xpose.msra.mxu0 0.0
  %437 = vmatprep.subr.mxu0 0.0
  %438 = vmatpush1.xpose.msra.mxu0 0.0
  %439 = vmatprep.subr.mxu0 0.0
  %440 = vmatpush1.xpose.msra.mxu0 0.0
  %441 = vmatprep.subr.mxu0 0.0
  %442 = vmatpush1.xpose.msra.mxu0 0.0
  %443 = vmatprep.subr.mxu0 0.0
  %444 = vmatpush1.xpose.msra.mxu0 0.0
  %445 = vmatprep.subr.mxu0 0.0
  %446 = vmatpush1.xpose.msra.mxu0 0.0
  %447 = vmatprep.subr.mxu0 0.0
  %448 = vmatpush1.xpose.msra.mxu0 0.0
  %449 = vmatprep.subr.mxu0 0.0
  %450 = vmatpush1.xpose.msra.mxu0 0.0
  %451 = vmatprep.subr.mxu0 0.0
  %452 = vmatpush1.xpose.msra.mxu0 0.0
  %453 = vmatprep.subr.mxu0 0.0
  %454 = vmatpush1.xpose.msra.mxu0 0.0
  %455 = vmatprep.subr.mxu0 0.0
  %456 = vmatpush1.xpose.msra.mxu0 0.0
  %457 = vmatprep.subr.mxu0 0.0
  %458 = vmatpush1.xpose.msra.mxu0 0.0
  %459 = vmatprep.subr.mxu0 0.0
  %460 = vmatpush1.xpose.msra.mxu0 0.0
  %461 = vmatprep.subr.mxu0 0.0
  %462 = vmatpush1.xpose.msra.mxu0 0.0
  %463 = vmatprep.subr.mxu0 0.0
  %464 = vmatpush1.xpose.msra.mxu0 0.0
  %465 = vmatprep.subr.mxu0 0.0
  %466 = vmatpush1.xpose.msra.mxu0 0.0
  %467 = vmatprep.mubr.f32.mxu0 0.0
  %468 = vmatmul.mubr.f32.gmra.mrb[0].mxu0 1.0
  %v469 = vpop.f32.mrb[0].mxu0
  %v470 = vadd.f32 0.0, %v469
  %v471 = vpop.f32.mrb[0].mxu0
  %472 = vdwg.mxu0
  %473 = vmatprep.subr.mxu0 0.0
  %474 = vmatpush1.xpose.msra.mxu0 %v387
  %475 = vmatprep.subr.mxu0 0.0
  %476 = vmatpush1.xpose.msra.mxu0 %v388
  %477 = vmatprep.subr.mxu0 0.0
  %478 = vmatpush1.xpose.msra.mxu0 %v389
  %479 = vmatprep.subr.mxu0 0.0
  %480 = vmatpush1.xpose.msra.mxu0 %v390
  %481 = vmatprep.subr.mxu0 0.0
  %482 = vmatpush1.xpose.msra.mxu0 %v391
  %483 = vmatprep.subr.mxu0 0.0
  %484 = vmatpush1.xpose.msra.mxu0 %v392
  %485 = vmatprep.subr.mxu0 0.0
  %486 = vmatpush1.xpose.msra.mxu0 %v393
  %487 = vmatprep.subr.mxu0 0.0
  %488 = vmatpush1.xpose.msra.mxu0 %v394
  %489 = vmatprep.subr.mxu0 0.0
  %490 = vmatpush1.xpose.msra.mxu0 %v395
  %491 = vmatprep.subr.mxu0 0.0
  %492 = vmatpush1.xpose.msra.mxu0 %v396
  %493 = vmatprep.subr.mxu0 0.0
  %494 = vmatpush1.xpose.msra.mxu0 %v397
  %495 = vmatprep.subr.mxu0 0.0
  %496 = vmatpush1.xpose.msra.mxu0 %v398
  %497 = vmatprep.subr.mxu0 0.0
  %498 = vmatpush1.xpose.msra.mxu0 %v399
  %499 = vmatprep.subr.mxu0 0.0
  %500 = vmatpush1.xpose.msra.mxu0 %v400
  %501 = vmatprep.subr.mxu0 0.0
  %502 = vmatpush1.xpose.msra.mxu0 %v401
  %503 = vmatprep.subr.mxu0 0.0
  %504 = vmatpush1.xpose.msra.mxu0 %v402
  %505 = vmatprep.subr.mxu0 0.0
  %506 = vmatpush1.xpose.msra.mxu0 0.0
  %507 = vmatprep.subr.mxu0 0.0
  %508 = vmatpush1.xpose.msra.mxu0 0.0
  %509 = vmatprep.subr.mxu0 0.0
  %510 = vmatpush1.xpose.msra.mxu0 0.0
  %511 = vmatprep.subr.mxu0 0.0
  %512 = vmatpush1.xpose.msra.mxu0 0.0
  %513 = vmatprep.subr.mxu0 0.0
  %514 = vmatpush1.xpose.msra.mxu0 0.0
  %515 = vmatprep.subr.mxu0 0.0
  %516 = vmatpush1.xpose.msra.mxu0 0.0
  %517 = vmatprep.subr.mxu0 0.0
  %518 = vmatpush1.xpose.msra.mxu0 0.0
  %519 = vmatprep.subr.mxu0 0.0
  %520 = vmatpush1.xpose.msra.mxu0 0.0
  %521 = vmatprep.subr.mxu0 0.0
  %522 = vmatpush1.xpose.msra.mxu0 0.0
  %523 = vmatprep.subr.mxu0 0.0
  %524 = vmatpush1.xpose.msra.mxu0 0.0
  %525 = vmatprep.subr.mxu0 0.0
  %526 = vmatpush1.xpose.msra.mxu0 0.0
  %527 = vmatprep.subr.mxu0 0.0
  %528 = vmatpush1.xpose.msra.mxu0 0.0
  %529 = vmatprep.subr.mxu0 0.0
  %530 = vmatpush1.xpose.msra.mxu0 0.0
  %531 = vmatprep.subr.mxu0 0.0
  %532 = vmatpush1.xpose.msra.mxu0 0.0
  %533 = vmatprep.subr.mxu0 0.0
  %534 = vmatpush1.xpose.msra.mxu0 0.0
  %535 = vmatprep.subr.mxu0 0.0
  %536 = vmatpush1.xpose.msra.mxu0 0.0
  %537 = vmatprep.mubr.f32.mxu0 0.0
  %538 = vmatmul.mubr.f32.gmra.mrb[0].mxu0 1.0
  %v539 = vpop.f32.mrb[0].mxu0
  %v540 = vadd.f32 0.0, %v539
  %v541 = vpop.f32.mrb[0].mxu0
  %542 = vdwg.mxu0
  %v543 = vsub.f32 0.0, %v470
  %v545 = vrot.slane %v540, 7
  %vm547 = vcmask 1040384
  %v548 = vsel %vm547, %v543, %v545
  %v549 = vmax.f32 %v548, 0.0
  %v550 = vand.u32 2147483647, %v548
  %v551 = vsub.f32 0.0, %v550
  %v552 = vmul.f32 %v551, 1.442695
  %v553 = vpow.pop %v552
  %v554 = vadd.f32 %v553, 1.0
  %v555 = vlog2.pop %v554
  %v556 = vmul.f32 %v555, 0.6931472
  %v557 = vmul.f32 -0.5, %v553
  %v558 = vadd.f32 %v557, 1.0
  %v559 = vmul.f32 %v558, %v553
  %v560 = vand.u32 2147483647, %v553
  %vm561 = vcmp.lt.f32.partialorder %v560, 0.0004427343
  %v562 = vsel %vm561, %v559, %v556
  %v563 = vadd.f32 %v549, %v562
  %564 = vst [vmem:[%s3] sm:$0x3] %v563
  // Predicated region
  $region14: #{dgi_forward.5} parent=0 // pred_check
    _
  $region15: #{dgi_forward.5} parent=0 // pred_check_branch
    %566 = sbr.rel (0) target = $region17
  $region16: #{dgi_forward.5} parent=0 // pred_region
    _
  $region17: #{dgi_forward.5} parent=0 // pred_fallthru
    _
  // Predicated region
  $region18: #{dgi_forward.5} parent=0 // pred_check
    _
  $region19: #{dgi_forward.5} parent=0 // pred_check_branch
    %568 = sbr.rel (0) target = $region21
  $region20: #{dgi_forward.5} parent=0 // pred_region
    _
  $region21: #{dgi_forward.5} parent=0 // pred_fallthru
    _

</llo_original>
